<compile_context>
chip_gen: v7x
topology: tpu7x:2x2x1
jax: 0.10.0
libtpu: 0.0.40
codegen_flags: <defaults>
</compile_context>

<pallas_src>
import functools

import jax
import jax.numpy as jnp
from jax import lax
from jax.experimental import pallas as pl
from jax.experimental.pallas import tpu as pltpu


# --------------------------------------------------------------------------
# Fused kernel: BiLSTM + BatchNorm1d(training stats) + Linear + Sigmoid
# --------------------------------------------------------------------------
def _fused_lstm_bn_fc_kernel(xcat_ref, mask_ref, wih_ref, b_ref, whh_ref,
                             gamma_ref, beta_ref, wfc_ref, bfc_ref,
                             o_ref, *, T, B, Bp, H):
    """Single-invocation fused forward pass.

    xcat_ref  : (T*Bp, 2I)  row (s,b) = [x[s,b] | x[T-1-s,b]]  (time-major, batch padded)
    mask_ref  : (T*Bp, 1)   1.0 for real rows, 0.0 for batch-padding rows
    wih_ref   : (2I, 8H)    block input weights, gate layout [i|f|o|g], fwd|bwd per gate
    b_ref     : (1, 8H)     folded biases (bih+bhh), same layout
    whh_ref   : (2H, 8H)    block-diagonal recurrent weights (rows 0:H fwd, H:2H bwd)
    gamma/beta: (1, 2H)     BatchNorm affine params (features = [h_f | h_b])
    wfc_ref   : (2H, Opad)  FC weight (transposed), zero-padded to 128 lanes
    bfc_ref   : (1, Opad)   FC bias, zero-padded
    o_ref     : (T*Bp, Opad) lane-dense output, row r = t*Bp + b
    """
    H2 = 2 * H
    f32 = jnp.float32

    # Pre-pass: input projections for both directions, all timesteps, one MXU
    # matmul off the serial recurrence path. Biases folded in here.
    xp = (jnp.dot(xcat_ref[...], wih_ref[...], preferred_element_type=f32)
          + b_ref[...])                                          # (T*Bp, 8H)

    whh = whh_ref[...]                                           # (2H, 8H), read once

    h = jnp.zeros((Bp, H2), f32)                                 # [h_f | h_b]
    c = jnp.zeros((Bp, H2), f32)                                 # [c_f | c_b]

    # Fully-unrolled merged recurrence: at step s the forward half advances
    # time s and the backward half advances time T-1-s, in one matmul.
    h_steps = []
    for s in range(T):
        pre = xp[s * Bp:(s + 1) * Bp, :] + jnp.dot(h, whh,
                                                   preferred_element_type=f32)
        sg = jax.nn.sigmoid(pre[:, 0:3 * H2])     # i, f, o gates (both dirs)
        gg = jnp.tanh(pre[:, 3 * H2:4 * H2])      # g gate (both dirs)
        i_g = sg[:, 0:H2]
        f_g = sg[:, H2:2 * H2]
        o_g = sg[:, 2 * H2:3 * H2]
        c = f_g * c + i_g * gg
        h = o_g * jnp.tanh(c)
        h_steps.append(h)

    # Re-pair halves per true timestep t: forward half of step t with the
    # backward half produced at step T-1-t. Pure value (vreg) ops, no scratch.
    yf = jnp.concatenate([h_steps[t][:, 0:H] for t in range(T)], axis=0)
    yb = jnp.concatenate([h_steps[T - 1 - t][:, H:H2] for t in range(T)], axis=0)
    y = jnp.concatenate([yf, yb], axis=1)                        # (T*Bp, 2H)

    # BatchNorm1d, training-mode (biased) batch statistics over real rows only.
    maskf = mask_ref[...]                                        # (T*Bp, 1)
    inv_n = 1.0 / float(T * B)
    mean = jnp.sum(y * maskf, axis=0, keepdims=True) * inv_n
    d = (y - mean) * maskf
    var = jnp.sum(d * d, axis=0, keepdims=True) * inv_n
    norm = (y - mean) * lax.rsqrt(var + 1e-5) * gamma_ref[...] + beta_ref[...]

    # Linear + sigmoid, lane-dense (128-padded) output.
    z = jnp.dot(norm, wfc_ref[...], preferred_element_type=f32) + bfc_ref[...]
    o_ref[...] = jax.nn.sigmoid(z)


# --------------------------------------------------------------------------
# One-time parameter layout preparation (outside the per-call forward)
# --------------------------------------------------------------------------
def prepare_params(params):
    f32 = jnp.float32
    H = params["whh_f"].shape[1]
    I = params["wih_f"].shape[1]
    O = params["w_fc"].shape[0]
    o_pad = ((O + 127) // 128) * 128

    def gates_T(w):
        # (4H, X) PyTorch gate order [i; f; g; o] -> transposed per-gate (X, H)
        return (w[0:H].T, w[H:2 * H].T, w[2 * H:3 * H].T, w[3 * H:4 * H].T)

    # Input weights -> (2I, 8H); rows 0:I multiply x[t] (forward), rows I:2I
    # multiply x[T-1-t] (backward). Gate columns: [i_f|i_b|f_f|f_b|o_f|o_b|g_f|g_b].
    i_f, f_f, g_f, o_f = gates_T(params["wih_f"].astype(f32))
    i_b, f_b, g_b, o_b = gates_T(params["wih_b"].astype(f32))
    zI = jnp.zeros((I, H), f32)
    wih_cat = jnp.concatenate([
        jnp.concatenate([i_f, zI, f_f, zI, o_f, zI, g_f, zI], axis=1),
        jnp.concatenate([zI, i_b, zI, f_b, zI, o_b, zI, g_b], axis=1),
    ], axis=0)                                                    # (2I, 8H)

    # Recurrent weights -> block-diagonal (2H, 8H): rows 0:H are h_f, H:2H are h_b.
    hi_f, hf_f, hg_f, ho_f = gates_T(params["whh_f"].astype(f32))
    hi_b, hf_b, hg_b, ho_b = gates_T(params["whh_b"].astype(f32))
    zH = jnp.zeros((H, H), f32)
    whh_cat = jnp.concatenate([
        jnp.concatenate([hi_f, zH, hf_f, zH, ho_f, zH, hg_f, zH], axis=1),
        jnp.concatenate([zH, hi_b, zH, hf_b, zH, ho_b, zH, hg_b], axis=1),
    ], axis=0)                                                    # (2H, 8H)

    def bias_gates(b):
        return b[0:H], b[H:2 * H], b[2 * H:3 * H], b[3 * H:4 * H]

    bsum_f = (params["bih_f"] + params["bhh_f"]).astype(f32)
    bsum_b = (params["bih_b"] + params["bhh_b"]).astype(f32)
    bif, bff, bgf, bof = bias_gates(bsum_f)
    bib, bfb, bgb, bob = bias_gates(bsum_b)
    b_cat = jnp.concatenate(
        [bif, bib, bff, bfb, bof, bob, bgf, bgb]).reshape(1, 8 * H)

    wfc_pad = jnp.zeros((2 * H, o_pad), f32).at[:, :O].set(
        params["w_fc"].T.astype(f32))
    bfc_pad = jnp.zeros((1, o_pad), f32).at[:, :O].set(
        params["b_fc"].reshape(1, O).astype(f32))

    return {
        "wih_cat": wih_cat,
        "b_cat": b_cat,
        "whh_cat": whh_cat,
        "gamma": params["gamma"].reshape(1, 2 * H).astype(f32),
        "beta": params["beta"].reshape(1, 2 * H).astype(f32),
        "wfc_pad": wfc_pad,
        "bfc_pad": bfc_pad,
        "hidden": H,
        "out_features": O,
    }


# --------------------------------------------------------------------------
# Forward wrapper
# --------------------------------------------------------------------------
def lstm_model_forward(x, prepped):
    """x: (B, T, I) float32, batch_first like the PyTorch module. Returns (B, T, O)."""
    B, T, I = x.shape
    H = prepped["hidden"]
    O = prepped["out_features"]
    o_pad = prepped["wfc_pad"].shape[1]
    f32 = jnp.float32

    Bp = ((B + 7) // 8) * 8                                       # sublane-aligned batch

    # Time-major, batch-padded input; merged-step operand row (s,b) carries
    # [x[s,b] | x[T-1-s,b]] so one matmul feeds both direction halves.
    # (Wrapper-side layout prep is negligible at these shapes.)
    x_tm = jnp.transpose(x, (1, 0, 2)).astype(f32)                # (T, B, I)
    x_tm = jnp.pad(x_tm, ((0, 0), (0, Bp - B), (0, 0)))           # (T, Bp, I)
    x_cat = jnp.concatenate([x_tm, x_tm[::-1]], axis=-1).reshape(T * Bp, 2 * I)

    row_mask = ((jnp.arange(T * Bp) % Bp) < B).astype(f32).reshape(T * Bp, 1)

    vmem = pl.BlockSpec(memory_space=pltpu.MemorySpace.VMEM)

    out_pad = pl.pallas_call(
        functools.partial(_fused_lstm_bn_fc_kernel, T=T, B=B, Bp=Bp, H=H),
        out_shape=jax.ShapeDtypeStruct((T * Bp, o_pad), f32),
        in_specs=[vmem] * 9,
        out_specs=vmem,
    )(
        x_cat, row_mask,
        prepped["wih_cat"], prepped["b_cat"], prepped["whh_cat"],
        prepped["gamma"], prepped["beta"],
        prepped["wfc_pad"], prepped["bfc_pad"],
    )

    out = out_pad.reshape(T, Bp, o_pad)[:, :B, :O]                # drop pad rows/lanes
    return jnp.transpose(out, (1, 0, 2))                          # (B, T, O)


# --------------------------------------------------------------------------
# Pure-JAX reference (correctness check)
# --------------------------------------------------------------------------
def _ref_dir(x_tm, wih, whh, b):
    T, B, _ = x_tm.shape
    H = whh.shape[1]
    h = jnp.zeros((B, H), jnp.float32)
    c = jnp.zeros((B, H), jnp.float32)
    outs = []
    for t in range(T):
        g = x_tm[t] @ wih.T + h @ whh.T + b
        i = jax.nn.sigmoid(g[:, :H])
        f = jax.nn.sigmoid(g[:, H:2 * H])
        gg = jnp.tanh(g[:, 2 * H:3 * H])
        o = jax.nn.sigmoid(g[:, 3 * H:4 * H])
        c = f * c + i * gg
        h = o * jnp.tanh(c)
        outs.append(h)
    return jnp.stack(outs)                                        # (T, B, H)


def ref_forward(x, p):
    B, T, I = x.shape
    H = p["whh_f"].shape[1]
    x_tm = jnp.transpose(x, (1, 0, 2))
    of = _ref_dir(x_tm, p["wih_f"], p["whh_f"], p["bih_f"] + p["bhh_f"])
    ob = _ref_dir(x_tm[::-1], p["wih_b"], p["whh_b"], p["bih_b"] + p["bhh_b"])[::-1]
    lstm_out = jnp.concatenate([of, ob], axis=-1)                 # (T, B, 2H)
    lstm_out = jnp.transpose(lstm_out, (1, 0, 2)).reshape(B * T, 2 * H)
    mean = jnp.mean(lstm_out, axis=0, keepdims=True)
    var = jnp.mean((lstm_out - mean) ** 2, axis=0, keepdims=True)
    norm = (lstm_out - mean) / jnp.sqrt(var + 1e-5) * p["gamma"] + p["beta"]
    out = jax.nn.sigmoid(norm @ p["w_fc"].T + p["b_fc"])
    return out.reshape(B, T, -1)


# --------------------------------------------------------------------------
if __name__ == "__main__":
    B, T, I, H, O = 2, 8, 16, 32, 8

    key = jax.random.PRNGKey(0)
    ks = jax.random.split(key, 16)
    k_scale = 1.0 / jnp.sqrt(H)

    def unif(k, shape):
        return jax.random.uniform(k, shape, jnp.float32, -k_scale, k_scale)

    params = {
        "wih_f": unif(ks[0], (4 * H, I)),
        "whh_f": unif(ks[1], (4 * H, H)),
        "bih_f": unif(ks[2], (4 * H,)),
        "bhh_f": unif(ks[3], (4 * H,)),
        "wih_b": unif(ks[4], (4 * H, I)),
        "whh_b": unif(ks[5], (4 * H, H)),
        "bih_b": unif(ks[6], (4 * H,)),
        "bhh_b": unif(ks[7], (4 * H,)),
        "gamma": 1.0 + 0.1 * jax.random.normal(ks[8], (2 * H,), jnp.float32),
        "beta": 0.1 * jax.random.normal(ks[9], (2 * H,), jnp.float32),
        "w_fc": unif(ks[10], (O, 2 * H)),
        "b_fc": unif(ks[11], (O,)),
    }

    x = jax.random.normal(ks[12], (B, T, I), jnp.float32)

    prepped = prepare_params(params)
    out = lstm_model_forward(x, prepped)
    out = jax.block_until_ready(out)

    ref = ref_forward(x, params)
    assert out.shape == (B, T, O)
    assert jnp.allclose(out, ref, atol=1e-4, rtol=1e-4), (
        f"max abs diff {jnp.max(jnp.abs(out - ref))}")

    print("KERNEL_OK")
</pallas_src>

<mosaic_0001>
module attributes {stable_mosaic.version = 11 : i64} {
  func.func @_fused_lstm_bn_fc_kernel(%arg0: memref<64x32xf32, #tpu.memory_space<vmem>>, %arg1: memref<64x1xf32, #tpu.memory_space<vmem>>, %arg2: memref<32x256xf32, #tpu.memory_space<vmem>>, %arg3: memref<1x256xf32, #tpu.memory_space<vmem>>, %arg4: memref<64x256xf32, #tpu.memory_space<vmem>>, %arg5: memref<1x64xf32, #tpu.memory_space<vmem>>, %arg6: memref<1x64xf32, #tpu.memory_space<vmem>>, %arg7: memref<64x128xf32, #tpu.memory_space<vmem>>, %arg8: memref<1x128xf32, #tpu.memory_space<vmem>>, %arg9: memref<64x128xf32, #tpu.memory_space<vmem>>) attributes {dimension_semantics = [], scalar_prefetch = 0 : i64, scratch_operands = 0 : i64, tpu.core_type = #tpu.core_type<tc>} {
    %c0 = arith.constant 0 : index
    %c0_0 = arith.constant 0 : index
    %0 = vector.load %arg0[%c0, %c0_0] : memref<64x32xf32, #tpu.memory_space<vmem>>, vector<64x32xf32>
    %c0_1 = arith.constant 0 : index
    %c0_2 = arith.constant 0 : index
    %1 = vector.load %arg2[%c0_1, %c0_2] : memref<32x256xf32, #tpu.memory_space<vmem>>, vector<32x256xf32>
    %cst = arith.constant dense<0.000000e+00> : vector<64x256xf32>
    %2 = tpu.matmul %0, %1, %cst {dimension_numbers = #tpu.dot_dimension_numbers<[1], [0], [0], [1], [0, 0, 1, 1], [], []>} : vector<64x32xf32>, vector<32x256xf32>, vector<64x256xf32> -> vector<64x256xf32>
    %c0_3 = arith.constant 0 : index
    %c0_4 = arith.constant 0 : index
    %3 = vector.load %arg3[%c0_3, %c0_4] : memref<1x256xf32, #tpu.memory_space<vmem>>, vector<1x256xf32>
    %4 = vector.broadcast %3 : vector<1x256xf32> to vector<64x256xf32>
    %5 = arith.addf %2, %4 : vector<64x256xf32>
    %c0_5 = arith.constant 0 : index
    %c0_6 = arith.constant 0 : index
    %6 = vector.load %arg4[%c0_5, %c0_6] : memref<64x256xf32, #tpu.memory_space<vmem>>, vector<64x256xf32>
    %cst_7 = arith.constant 0.000000e+00 : f32
    %7 = vector.broadcast %cst_7 : f32 to vector<8x64xf32>
    %cst_8 = arith.constant 0.000000e+00 : f32
    %8 = vector.broadcast %cst_8 : f32 to vector<8x64xf32>
    %9 = vector.extract_strided_slice %5 {offsets = [0, 0], sizes = [8, 256], strides = [1, 1]} : vector<64x256xf32> to vector<8x256xf32>
    %cst_9 = arith.constant dense<0.000000e+00> : vector<8x256xf32>
    %10 = tpu.matmul %7, %6, %cst_9 {dimension_numbers = #tpu.dot_dimension_numbers<[1], [0], [0], [1], [0, 0, 1, 1], [], []>} : vector<8x64xf32>, vector<64x256xf32>, vector<8x256xf32> -> vector<8x256xf32>
    %11 = arith.addf %9, %10 : vector<8x256xf32>
    %12 = vector.extract_strided_slice %11 {offsets = [0, 0], sizes = [8, 192], strides = [1, 1]} : vector<8x256xf32> to vector<8x192xf32>
    %13 = arith.negf %12 : vector<8x192xf32>
    %14 = math.exp %13 : vector<8x192xf32>
    %cst_10 = arith.constant 1.000000e+00 : f32
    %15 = vector.broadcast %cst_10 : f32 to vector<8x192xf32>
    %16 = arith.addf %15, %14 : vector<8x192xf32>
    %17 = arith.divf %15, %16 : vector<8x192xf32>
    %18 = vector.extract_strided_slice %11 {offsets = [0, 192], sizes = [8, 64], strides = [1, 1]} : vector<8x256xf32> to vector<8x64xf32>
    %19 = math.tanh %18 : vector<8x64xf32>
    %20 = vector.extract_strided_slice %17 {offsets = [0, 0], sizes = [8, 64], strides = [1, 1]} : vector<8x192xf32> to vector<8x64xf32>
    %21 = vector.extract_strided_slice %17 {offsets = [0, 64], sizes = [8, 64], strides = [1, 1]} : vector<8x192xf32> to vector<8x64xf32>
    %22 = vector.extract_strided_slice %17 {offsets = [0, 128], sizes = [8, 64], strides = [1, 1]} : vector<8x192xf32> to vector<8x64xf32>
    %23 = arith.mulf %21, %8 : vector<8x64xf32>
    %24 = arith.mulf %20, %19 : vector<8x64xf32>
    %25 = arith.addf %23, %24 : vector<8x64xf32>
    %26 = math.tanh %25 : vector<8x64xf32>
    %27 = arith.mulf %22, %26 : vector<8x64xf32>
    %28 = vector.extract_strided_slice %5 {offsets = [8, 0], sizes = [8, 256], strides = [1, 1]} : vector<64x256xf32> to vector<8x256xf32>
    %cst_11 = arith.constant dense<0.000000e+00> : vector<8x256xf32>
    %29 = tpu.matmul %27, %6, %cst_11 {dimension_numbers = #tpu.dot_dimension_numbers<[1], [0], [0], [1], [0, 0, 1, 1], [], []>} : vector<8x64xf32>, vector<64x256xf32>, vector<8x256xf32> -> vector<8x256xf32>
    %30 = arith.addf %28, %29 : vector<8x256xf32>
    %31 = vector.extract_strided_slice %30 {offsets = [0, 0], sizes = [8, 192], strides = [1, 1]} : vector<8x256xf32> to vector<8x192xf32>
    %32 = arith.negf %31 : vector<8x192xf32>
    %33 = math.exp %32 : vector<8x192xf32>
    %cst_12 = arith.constant 1.000000e+00 : f32
    %34 = vector.broadcast %cst_12 : f32 to vector<8x192xf32>
    %35 = arith.addf %34, %33 : vector<8x192xf32>
    %36 = arith.divf %34, %35 : vector<8x192xf32>
    %37 = vector.extract_strided_slice %30 {offsets = [0, 192], sizes = [8, 64], strides = [1, 1]} : vector<8x256xf32> to vector<8x64xf32>
    %38 = math.tanh %37 : vector<8x64xf32>
    %39 = vector.extract_strided_slice %36 {offsets = [0, 0], sizes = [8, 64], strides = [1, 1]} : vector<8x192xf32> to vector<8x64xf32>
    %40 = vector.extract_strided_slice %36 {offsets = [0, 64], sizes = [8, 64], strides = [1, 1]} : vector<8x192xf32> to vector<8x64xf32>
    %41 = vector.extract_strided_slice %36 {offsets = [0, 128], sizes = [8, 64], strides = [1, 1]} : vector<8x192xf32> to vector<8x64xf32>
    %42 = arith.mulf %40, %25 : vector<8x64xf32>
    %43 = arith.mulf %39, %38 : vector<8x64xf32>
    %44 = arith.addf %42, %43 : vector<8x64xf32>
    %45 = math.tanh %44 : vector<8x64xf32>
    %46 = arith.mulf %41, %45 : vector<8x64xf32>
    %47 = vector.extract_strided_slice %5 {offsets = [16, 0], sizes = [8, 256], strides = [1, 1]} : vector<64x256xf32> to vector<8x256xf32>
    %cst_13 = arith.constant dense<0.000000e+00> : vector<8x256xf32>
    %48 = tpu.matmul %46, %6, %cst_13 {dimension_numbers = #tpu.dot_dimension_numbers<[1], [0], [0], [1], [0, 0, 1, 1], [], []>} : vector<8x64xf32>, vector<64x256xf32>, vector<8x256xf32> -> vector<8x256xf32>
    %49 = arith.addf %47, %48 : vector<8x256xf32>
    %50 = vector.extract_strided_slice %49 {offsets = [0, 0], sizes = [8, 192], strides = [1, 1]} : vector<8x256xf32> to vector<8x192xf32>
    %51 = arith.negf %50 : vector<8x192xf32>
    %52 = math.exp %51 : vector<8x192xf32>
    %cst_14 = arith.constant 1.000000e+00 : f32
    %53 = vector.broadcast %cst_14 : f32 to vector<8x192xf32>
    %54 = arith.addf %53, %52 : vector<8x192xf32>
    %55 = arith.divf %53, %54 : vector<8x192xf32>
    %56 = vector.extract_strided_slice %49 {offsets = [0, 192], sizes = [8, 64], strides = [1, 1]} : vector<8x256xf32> to vector<8x64xf32>
    %57 = math.tanh %56 : vector<8x64xf32>
    %58 = vector.extract_strided_slice %55 {offsets = [0, 0], sizes = [8, 64], strides = [1, 1]} : vector<8x192xf32> to vector<8x64xf32>
    %59 = vector.extract_strided_slice %55 {offsets = [0, 64], sizes = [8, 64], strides = [1, 1]} : vector<8x192xf32> to vector<8x64xf32>
    %60 = vector.extract_strided_slice %55 {offsets = [0, 128], sizes = [8, 64], strides = [1, 1]} : vector<8x192xf32> to vector<8x64xf32>
    %61 = arith.mulf %59, %44 : vector<8x64xf32>
    %62 = arith.mulf %58, %57 : vector<8x64xf32>
    %63 = arith.addf %61, %62 : vector<8x64xf32>
    %64 = math.tanh %63 : vector<8x64xf32>
    %65 = arith.mulf %60, %64 : vector<8x64xf32>
    %66 = vector.extract_strided_slice %5 {offsets = [24, 0], sizes = [8, 256], strides = [1, 1]} : vector<64x256xf32> to vector<8x256xf32>
    %cst_15 = arith.constant dense<0.000000e+00> : vector<8x256xf32>
    %67 = tpu.matmul %65, %6, %cst_15 {dimension_numbers = #tpu.dot_dimension_numbers<[1], [0], [0], [1], [0, 0, 1, 1], [], []>} : vector<8x64xf32>, vector<64x256xf32>, vector<8x256xf32> -> vector<8x256xf32>
    %68 = arith.addf %66, %67 : vector<8x256xf32>
    %69 = vector.extract_strided_slice %68 {offsets = [0, 0], sizes = [8, 192], strides = [1, 1]} : vector<8x256xf32> to vector<8x192xf32>
    %70 = arith.negf %69 : vector<8x192xf32>
    %71 = math.exp %70 : vector<8x192xf32>
    %cst_16 = arith.constant 1.000000e+00 : f32
    %72 = vector.broadcast %cst_16 : f32 to vector<8x192xf32>
    %73 = arith.addf %72, %71 : vector<8x192xf32>
    %74 = arith.divf %72, %73 : vector<8x192xf32>
    %75 = vector.extract_strided_slice %68 {offsets = [0, 192], sizes = [8, 64], strides = [1, 1]} : vector<8x256xf32> to vector<8x64xf32>
    %76 = math.tanh %75 : vector<8x64xf32>
    %77 = vector.extract_strided_slice %74 {offsets = [0, 0], sizes = [8, 64], strides = [1, 1]} : vector<8x192xf32> to vector<8x64xf32>
    %78 = vector.extract_strided_slice %74 {offsets = [0, 64], sizes = [8, 64], strides = [1, 1]} : vector<8x192xf32> to vector<8x64xf32>
    %79 = vector.extract_strided_slice %74 {offsets = [0, 128], sizes = [8, 64], strides = [1, 1]} : vector<8x192xf32> to vector<8x64xf32>
    %80 = arith.mulf %78, %63 : vector<8x64xf32>
    %81 = arith.mulf %77, %76 : vector<8x64xf32>
    %82 = arith.addf %80, %81 : vector<8x64xf32>
    %83 = math.tanh %82 : vector<8x64xf32>
    %84 = arith.mulf %79, %83 : vector<8x64xf32>
    %85 = vector.extract_strided_slice %5 {offsets = [32, 0], sizes = [8, 256], strides = [1, 1]} : vector<64x256xf32> to vector<8x256xf32>
    %cst_17 = arith.constant dense<0.000000e+00> : vector<8x256xf32>
    %86 = tpu.matmul %84, %6, %cst_17 {dimension_numbers = #tpu.dot_dimension_numbers<[1], [0], [0], [1], [0, 0, 1, 1], [], []>} : vector<8x64xf32>, vector<64x256xf32>, vector<8x256xf32> -> vector<8x256xf32>
    %87 = arith.addf %85, %86 : vector<8x256xf32>
    %88 = vector.extract_strided_slice %87 {offsets = [0, 0], sizes = [8, 192], strides = [1, 1]} : vector<8x256xf32> to vector<8x192xf32>
    %89 = arith.negf %88 : vector<8x192xf32>
    %90 = math.exp %89 : vector<8x192xf32>
    %cst_18 = arith.constant 1.000000e+00 : f32
    %91 = vector.broadcast %cst_18 : f32 to vector<8x192xf32>
    %92 = arith.addf %91, %90 : vector<8x192xf32>
    %93 = arith.divf %91, %92 : vector<8x192xf32>
    %94 = vector.extract_strided_slice %87 {offsets = [0, 192], sizes = [8, 64], strides = [1, 1]} : vector<8x256xf32> to vector<8x64xf32>
    %95 = math.tanh %94 : vector<8x64xf32>
    %96 = vector.extract_strided_slice %93 {offsets = [0, 0], sizes = [8, 64], strides = [1, 1]} : vector<8x192xf32> to vector<8x64xf32>
    %97 = vector.extract_strided_slice %93 {offsets = [0, 64], sizes = [8, 64], strides = [1, 1]} : vector<8x192xf32> to vector<8x64xf32>
    %98 = vector.extract_strided_slice %93 {offsets = [0, 128], sizes = [8, 64], strides = [1, 1]} : vector<8x192xf32> to vector<8x64xf32>
    %99 = arith.mulf %97, %82 : vector<8x64xf32>
    %100 = arith.mulf %96, %95 : vector<8x64xf32>
    %101 = arith.addf %99, %100 : vector<8x64xf32>
    %102 = math.tanh %101 : vector<8x64xf32>
    %103 = arith.mulf %98, %102 : vector<8x64xf32>
    %104 = vector.extract_strided_slice %5 {offsets = [40, 0], sizes = [8, 256], strides = [1, 1]} : vector<64x256xf32> to vector<8x256xf32>
    %cst_19 = arith.constant dense<0.000000e+00> : vector<8x256xf32>
    %105 = tpu.matmul %103, %6, %cst_19 {dimension_numbers = #tpu.dot_dimension_numbers<[1], [0], [0], [1], [0, 0, 1, 1], [], []>} : vector<8x64xf32>, vector<64x256xf32>, vector<8x256xf32> -> vector<8x256xf32>
    %106 = arith.addf %104, %105 : vector<8x256xf32>
    %107 = vector.extract_strided_slice %106 {offsets = [0, 0], sizes = [8, 192], strides = [1, 1]} : vector<8x256xf32> to vector<8x192xf32>
    %108 = arith.negf %107 : vector<8x192xf32>
    %109 = math.exp %108 : vector<8x192xf32>
    %cst_20 = arith.constant 1.000000e+00 : f32
    %110 = vector.broadcast %cst_20 : f32 to vector<8x192xf32>
    %111 = arith.addf %110, %109 : vector<8x192xf32>
    %112 = arith.divf %110, %111 : vector<8x192xf32>
    %113 = vector.extract_strided_slice %106 {offsets = [0, 192], sizes = [8, 64], strides = [1, 1]} : vector<8x256xf32> to vector<8x64xf32>
    %114 = math.tanh %113 : vector<8x64xf32>
    %115 = vector.extract_strided_slice %112 {offsets = [0, 0], sizes = [8, 64], strides = [1, 1]} : vector<8x192xf32> to vector<8x64xf32>
    %116 = vector.extract_strided_slice %112 {offsets = [0, 64], sizes = [8, 64], strides = [1, 1]} : vector<8x192xf32> to vector<8x64xf32>
    %117 = vector.extract_strided_slice %112 {offsets = [0, 128], sizes = [8, 64], strides = [1, 1]} : vector<8x192xf32> to vector<8x64xf32>
    %118 = arith.mulf %116, %101 : vector<8x64xf32>
    %119 = arith.mulf %115, %114 : vector<8x64xf32>
    %120 = arith.addf %118, %119 : vector<8x64xf32>
    %121 = math.tanh %120 : vector<8x64xf32>
    %122 = arith.mulf %117, %121 : vector<8x64xf32>
    %123 = vector.extract_strided_slice %5 {offsets = [48, 0], sizes = [8, 256], strides = [1, 1]} : vector<64x256xf32> to vector<8x256xf32>
    %cst_21 = arith.constant dense<0.000000e+00> : vector<8x256xf32>
    %124 = tpu.matmul %122, %6, %cst_21 {dimension_numbers = #tpu.dot_dimension_numbers<[1], [0], [0], [1], [0, 0, 1, 1], [], []>} : vector<8x64xf32>, vector<64x256xf32>, vector<8x256xf32> -> vector<8x256xf32>
    %125 = arith.addf %123, %124 : vector<8x256xf32>
    %126 = vector.extract_strided_slice %125 {offsets = [0, 0], sizes = [8, 192], strides = [1, 1]} : vector<8x256xf32> to vector<8x192xf32>
    %127 = arith.negf %126 : vector<8x192xf32>
    %128 = math.exp %127 : vector<8x192xf32>
    %cst_22 = arith.constant 1.000000e+00 : f32
    %129 = vector.broadcast %cst_22 : f32 to vector<8x192xf32>
    %130 = arith.addf %129, %128 : vector<8x192xf32>
    %131 = arith.divf %129, %130 : vector<8x192xf32>
    %132 = vector.extract_strided_slice %125 {offsets = [0, 192], sizes = [8, 64], strides = [1, 1]} : vector<8x256xf32> to vector<8x64xf32>
    %133 = math.tanh %132 : vector<8x64xf32>
    %134 = vector.extract_strided_slice %131 {offsets = [0, 0], sizes = [8, 64], strides = [1, 1]} : vector<8x192xf32> to vector<8x64xf32>
    %135 = vector.extract_strided_slice %131 {offsets = [0, 64], sizes = [8, 64], strides = [1, 1]} : vector<8x192xf32> to vector<8x64xf32>
    %136 = vector.extract_strided_slice %131 {offsets = [0, 128], sizes = [8, 64], strides = [1, 1]} : vector<8x192xf32> to vector<8x64xf32>
    %137 = arith.mulf %135, %120 : vector<8x64xf32>
    %138 = arith.mulf %134, %133 : vector<8x64xf32>
    %139 = arith.addf %137, %138 : vector<8x64xf32>
    %140 = math.tanh %139 : vector<8x64xf32>
    %141 = arith.mulf %136, %140 : vector<8x64xf32>
    %142 = vector.extract_strided_slice %5 {offsets = [56, 0], sizes = [8, 256], strides = [1, 1]} : vector<64x256xf32> to vector<8x256xf32>
    %cst_23 = arith.constant dense<0.000000e+00> : vector<8x256xf32>
    %143 = tpu.matmul %141, %6, %cst_23 {dimension_numbers = #tpu.dot_dimension_numbers<[1], [0], [0], [1], [0, 0, 1, 1], [], []>} : vector<8x64xf32>, vector<64x256xf32>, vector<8x256xf32> -> vector<8x256xf32>
    %144 = arith.addf %142, %143 : vector<8x256xf32>
    %145 = vector.extract_strided_slice %144 {offsets = [0, 0], sizes = [8, 192], strides = [1, 1]} : vector<8x256xf32> to vector<8x192xf32>
    %146 = arith.negf %145 : vector<8x192xf32>
    %147 = math.exp %146 : vector<8x192xf32>
    %cst_24 = arith.constant 1.000000e+00 : f32
    %148 = vector.broadcast %cst_24 : f32 to vector<8x192xf32>
    %149 = arith.addf %148, %147 : vector<8x192xf32>
    %150 = arith.divf %148, %149 : vector<8x192xf32>
    %151 = vector.extract_strided_slice %144 {offsets = [0, 192], sizes = [8, 64], strides = [1, 1]} : vector<8x256xf32> to vector<8x64xf32>
    %152 = math.tanh %151 : vector<8x64xf32>
    %153 = vector.extract_strided_slice %150 {offsets = [0, 0], sizes = [8, 64], strides = [1, 1]} : vector<8x192xf32> to vector<8x64xf32>
    %154 = vector.extract_strided_slice %150 {offsets = [0, 64], sizes = [8, 64], strides = [1, 1]} : vector<8x192xf32> to vector<8x64xf32>
    %155 = vector.extract_strided_slice %150 {offsets = [0, 128], sizes = [8, 64], strides = [1, 1]} : vector<8x192xf32> to vector<8x64xf32>
    %156 = arith.mulf %154, %139 : vector<8x64xf32>
    %157 = arith.mulf %153, %152 : vector<8x64xf32>
    %158 = arith.addf %156, %157 : vector<8x64xf32>
    %159 = math.tanh %158 : vector<8x64xf32>
    %160 = arith.mulf %155, %159 : vector<8x64xf32>
    %161 = vector.extract_strided_slice %27 {offsets = [0, 0], sizes = [8, 32], strides = [1, 1]} : vector<8x64xf32> to vector<8x32xf32>
    %162 = vector.extract_strided_slice %46 {offsets = [0, 0], sizes = [8, 32], strides = [1, 1]} : vector<8x64xf32> to vector<8x32xf32>
    %163 = vector.extract_strided_slice %65 {offsets = [0, 0], sizes = [8, 32], strides = [1, 1]} : vector<8x64xf32> to vector<8x32xf32>
    %164 = vector.extract_strided_slice %84 {offsets = [0, 0], sizes = [8, 32], strides = [1, 1]} : vector<8x64xf32> to vector<8x32xf32>
    %165 = vector.extract_strided_slice %103 {offsets = [0, 0], sizes = [8, 32], strides = [1, 1]} : vector<8x64xf32> to vector<8x32xf32>
    %166 = vector.extract_strided_slice %122 {offsets = [0, 0], sizes = [8, 32], strides = [1, 1]} : vector<8x64xf32> to vector<8x32xf32>
    %167 = vector.extract_strided_slice %141 {offsets = [0, 0], sizes = [8, 32], strides = [1, 1]} : vector<8x64xf32> to vector<8x32xf32>
    %168 = vector.extract_strided_slice %160 {offsets = [0, 0], sizes = [8, 32], strides = [1, 1]} : vector<8x64xf32> to vector<8x32xf32>
    %169 = tpu.concatenate %161, %162, %163, %164, %165, %166, %167, %168 in 0 : vector<8x32xf32>, vector<8x32xf32>, vector<8x32xf32>, vector<8x32xf32>, vector<8x32xf32>, vector<8x32xf32>, vector<8x32xf32>, vector<8x32xf32> -> vector<64x32xf32>
    %170 = vector.extract_strided_slice %160 {offsets = [0, 32], sizes = [8, 32], strides = [1, 1]} : vector<8x64xf32> to vector<8x32xf32>
    %171 = vector.extract_strided_slice %141 {offsets = [0, 32], sizes = [8, 32], strides = [1, 1]} : vector<8x64xf32> to vector<8x32xf32>
    %172 = vector.extract_strided_slice %122 {offsets = [0, 32], sizes = [8, 32], strides = [1, 1]} : vector<8x64xf32> to vector<8x32xf32>
    %173 = vector.extract_strided_slice %103 {offsets = [0, 32], sizes = [8, 32], strides = [1, 1]} : vector<8x64xf32> to vector<8x32xf32>
    %174 = vector.extract_strided_slice %84 {offsets = [0, 32], sizes = [8, 32], strides = [1, 1]} : vector<8x64xf32> to vector<8x32xf32>
    %175 = vector.extract_strided_slice %65 {offsets = [0, 32], sizes = [8, 32], strides = [1, 1]} : vector<8x64xf32> to vector<8x32xf32>
    %176 = vector.extract_strided_slice %46 {offsets = [0, 32], sizes = [8, 32], strides = [1, 1]} : vector<8x64xf32> to vector<8x32xf32>
    %177 = vector.extract_strided_slice %27 {offsets = [0, 32], sizes = [8, 32], strides = [1, 1]} : vector<8x64xf32> to vector<8x32xf32>
    %178 = tpu.concatenate %170, %171, %172, %173, %174, %175, %176, %177 in 0 : vector<8x32xf32>, vector<8x32xf32>, vector<8x32xf32>, vector<8x32xf32>, vector<8x32xf32>, vector<8x32xf32>, vector<8x32xf32>, vector<8x32xf32> -> vector<64x32xf32>
    %179 = tpu.concatenate %169, %178 in 1 : vector<64x32xf32>, vector<64x32xf32> -> vector<64x64xf32>
    %c0_25 = arith.constant 0 : index
    %c0_26 = arith.constant 0 : index
    %180 = vector.load %arg1[%c0_25, %c0_26] : memref<64x1xf32, #tpu.memory_space<vmem>>, vector<64x1xf32>
    %181 = vector.broadcast %180 : vector<64x1xf32> to vector<64x64xf32>
    %182 = arith.mulf %179, %181 : vector<64x64xf32>
    %cst_27 = arith.constant dense<0.000000e+00> : vector<64xf32>
    %183 = vector.multi_reduction <add>, %182, %cst_27 [0] : vector<64x64xf32> to vector<64xf32>
    %184 = vector.shape_cast %183 : vector<64xf32> to vector<1x64xf32>
    %cst_28 = arith.constant 6.250000e-02 : f32
    %185 = vector.broadcast %cst_28 : f32 to vector<1x64xf32>
    %186 = arith.mulf %184, %185 : vector<1x64xf32>
    %187 = vector.broadcast %186 : vector<1x64xf32> to vector<64x64xf32>
    %188 = arith.subf %179, %187 : vector<64x64xf32>
    %189 = vector.broadcast %180 : vector<64x1xf32> to vector<64x64xf32>
    %190 = arith.mulf %188, %189 : vector<64x64xf32>
    %191 = arith.mulf %190, %190 : vector<64x64xf32>
    %cst_29 = arith.constant dense<0.000000e+00> : vector<64xf32>
    %192 = vector.multi_reduction <add>, %191, %cst_29 [0] : vector<64x64xf32> to vector<64xf32>
    %193 = vector.shape_cast %192 : vector<64xf32> to vector<1x64xf32>
    %cst_30 = arith.constant 6.250000e-02 : f32
    %194 = vector.broadcast %cst_30 : f32 to vector<1x64xf32>
    %195 = arith.mulf %193, %194 : vector<1x64xf32>
    %196 = vector.broadcast %186 : vector<1x64xf32> to vector<64x64xf32>
    %197 = arith.subf %179, %196 : vector<64x64xf32>
    %cst_31 = arith.constant 9.99999974E-6 : f32
    %198 = vector.broadcast %cst_31 : f32 to vector<1x64xf32>
    %199 = arith.addf %195, %198 : vector<1x64xf32>
    %200 = math.rsqrt %199 : vector<1x64xf32>
    %201 = vector.broadcast %200 : vector<1x64xf32> to vector<64x64xf32>
    %202 = arith.mulf %197, %201 : vector<64x64xf32>
    %c0_32 = arith.constant 0 : index
    %c0_33 = arith.constant 0 : index
    %203 = vector.load %arg5[%c0_32, %c0_33] : memref<1x64xf32, #tpu.memory_space<vmem>>, vector<1x64xf32>
    %204 = vector.broadcast %203 : vector<1x64xf32> to vector<64x64xf32>
    %205 = arith.mulf %202, %204 : vector<64x64xf32>
    %c0_34 = arith.constant 0 : index
    %c0_35 = arith.constant 0 : index
    %206 = vector.load %arg6[%c0_34, %c0_35] : memref<1x64xf32, #tpu.memory_space<vmem>>, vector<1x64xf32>
    %207 = vector.broadcast %206 : vector<1x64xf32> to vector<64x64xf32>
    %208 = arith.addf %205, %207 : vector<64x64xf32>
    %c0_36 = arith.constant 0 : index
    %c0_37 = arith.constant 0 : index
    %209 = vector.load %arg7[%c0_36, %c0_37] : memref<64x128xf32, #tpu.memory_space<vmem>>, vector<64x128xf32>
    %cst_38 = arith.constant dense<0.000000e+00> : vector<64x128xf32>
    %210 = tpu.matmul %208, %209, %cst_38 {dimension_numbers = #tpu.dot_dimension_numbers<[1], [0], [0], [1], [0, 0, 1, 1], [], []>} : vector<64x64xf32>, vector<64x128xf32>, vector<64x128xf32> -> vector<64x128xf32>
    %c0_39 = arith.constant 0 : index
    %c0_40 = arith.constant 0 : index
    %211 = vector.load %arg8[%c0_39, %c0_40] : memref<1x128xf32, #tpu.memory_space<vmem>>, vector<1x128xf32>
    %212 = vector.broadcast %211 : vector<1x128xf32> to vector<64x128xf32>
    %213 = arith.addf %210, %212 : vector<64x128xf32>
    %214 = arith.negf %213 : vector<64x128xf32>
    %215 = math.exp %214 : vector<64x128xf32>
    %cst_41 = arith.constant 1.000000e+00 : f32
    %216 = vector.broadcast %cst_41 : f32 to vector<64x128xf32>
    %217 = arith.addf %216, %215 : vector<64x128xf32>
    %218 = arith.divf %216, %217 : vector<64x128xf32>
    %c0_42 = arith.constant 0 : index
    %c0_43 = arith.constant 0 : index
    %219 = vector.load %arg9[%c0_42, %c0_43] : memref<64x128xf32, #tpu.memory_space<vmem>>, vector<64x128xf32>
    tpu.vector_store %arg9[%c0_42, %c0_43], %218 {strides = array<i32>} : memref<64x128xf32, #tpu.memory_space<vmem>>, vector<64x128xf32>,
    return
  }
}

</mosaic_0001>

<llo_original>
// kernel: tpu_custom_call.1
$region0: #{tpu_custom_call.1}
  #allocation0 [shape = 'u32[]', space=smem, size = 0x4, offset = 0x4, fixed_abs, tag = 'smem constant byte address 0x4 - core index']
  #allocation1 [shape = 'u32[144,128]{1,0:T(1,128)}', space=vmem, size = 0x12000, scoped, tag = 'internal scratch']
  %s0 = inlined_call_operand.vmem [shape: f32[64,32], index: 0, kind: input, shape index: {}]
  %s1 = inlined_call_operand.vmem [shape: f32[64,1], index: 1, kind: input, shape index: {}]
  %s2 = inlined_call_operand.hbm [shape: f32[32,256], index: 2, kind: input, shape index: {}]
  %s3 = inlined_call_operand.vmem [shape: f32[1,256], index: 3, kind: input, shape index: {}]
  %s4 = inlined_call_operand.vmem [shape: f32[64,256], index: 4, kind: input, shape index: {}]
  %s5 = inlined_call_operand.vmem [shape: f32[1,64], index: 5, kind: input, shape index: {}]
  %s6 = inlined_call_operand.vmem [shape: f32[1,64], index: 6, kind: input, shape index: {}]
  %s7 = inlined_call_operand.hbm [shape: f32[64,128], index: 7, kind: input, shape index: {}]
  %s8 = inlined_call_operand.vmem [shape: f32[1,128], index: 8, kind: input, shape index: {}]
  %s9 = inlined_call_operand.hbm [shape: f32[64,128], index: 9, kind: output, shape index: {}]
  %s10 = sld [smem:[#allocation0]]
  $region54: #{tpu_custom_call.1} parent=0
    _
  %s12 = ssub.s32 1, %s10
  %s13 = scalar_select 0, %s12, %s10
  $region1: #{tpu_custom_call.1} parent=0
    #allocation2 [shape = 'u8[32768]{0}', space=vmem, size = 0x8000, scoped, tag = 'input window, operand 2, single buffered']
    #allocation3 [shape = 's32[1]{0}', space=sflag, size = 0x4, scoped, tag = 'scoped memory for tpu_custom_call.1']
    #allocation4 [shape = 's32[1]{0}', space=sflag, size = 0x4, scoped, tag = 'scoped memory for tpu_custom_call.1']
    #allocation5 [shape = 'u8[32768]{0}', space=vmem, size = 0x8000, scoped, tag = 'input window, operand 7, single buffered']
    #allocation6 [shape = 's32[1]{0}', space=sflag, size = 0x4, scoped, tag = 'scoped memory for tpu_custom_call.1']
    #allocation7 [shape = 'u8[32768]{0}', space=vmem, size = 0x8000, scoped, tag = 'output window, operand 0, single buffered']
    %14 = vsyncpa [#allocation3], 0
    %15 = vsyncpa [#allocation6], 0
    %16 = vsyncpa [#allocation4], 0
    // Predicated region
    $region2: #{tpu_custom_call.1} parent=1 // pred_check
      _
    $region3: #{tpu_custom_call.1} parent=1 // pred_check_branch
      %18 = sbr.rel (0) target = $region5
    $region4: #{tpu_custom_call.1} parent=1 // pred_region
      _
    $region5: #{tpu_custom_call.1} parent=1 // pred_fallthru
      _
    // Predicated region
    $region6: #{tpu_custom_call.1} parent=1 // pred_check
      _
    $region7: #{tpu_custom_call.1} parent=1 // pred_check_branch
      %20 = sbr.rel (0) target = $region9
    $region8: #{tpu_custom_call.1} parent=1 // pred_region
      _
    $region9: #{tpu_custom_call.1} parent=1 // pred_fallthru
      _
    // Predicated region
    $region10: #{tpu_custom_call.1} parent=1 // pred_check
      _
    $region11: #{tpu_custom_call.1} parent=1 // pred_check_branch
      %22 = sbr.rel (0) target = $region13
    $region12: #{tpu_custom_call.1} parent=1 // pred_region
      %s24 = ssub.s32 1024, 1024
      %25 = vsyncadd [#allocation3], %s24
      %s26 = sshll.u32 [#allocation2], 4
      %s27 = int_to_ptr.vmem [resolvable:$true] %s26
      %32 = dma.hbm_to_vmem [thread:$0]  %s2, 1024, %s27, [#allocation3], 256, 256, 16
    $region13: #{tpu_custom_call.1} parent=1 // pred_fallthru
      _
    // Predicated region
    $region14: #{tpu_custom_call.1} parent=1 // pred_check
      _
    $region15: #{tpu_custom_call.1} parent=1 // pred_check_branch
      %34 = sbr.rel (0) target = $region17
    $region16: #{tpu_custom_call.1} parent=1 // pred_region
      _
    $region17: #{tpu_custom_call.1} parent=1 // pred_fallthru
      _
    // Predicated region
    $region18: #{tpu_custom_call.1} parent=1 // pred_check
      _
    $region19: #{tpu_custom_call.1} parent=1 // pred_check_branch
      %36 = sbr.rel (0) target = $region21
    $region20: #{tpu_custom_call.1} parent=1 // pred_region
      _
    $region21: #{tpu_custom_call.1} parent=1 // pred_fallthru
      _
    // Predicated region
    $region22: #{tpu_custom_call.1} parent=1 // pred_check
      _
    $region23: #{tpu_custom_call.1} parent=1 // pred_check_branch
      %38 = sbr.rel (0) target = $region25
    $region24: #{tpu_custom_call.1} parent=1 // pred_region
      _
    $region25: #{tpu_custom_call.1} parent=1 // pred_fallthru
      _
    // Predicated region
    $region26: #{tpu_custom_call.1} parent=1 // pred_check
      _
    $region27: #{tpu_custom_call.1} parent=1 // pred_check_branch
      %40 = sbr.rel (0) target = $region29
    $region28: #{tpu_custom_call.1} parent=1 // pred_region
      _
    $region29: #{tpu_custom_call.1} parent=1 // pred_fallthru
      _
    // Predicated region
    $region30: #{tpu_custom_call.1} parent=1 // pred_check
      _
    $region31: #{tpu_custom_call.1} parent=1 // pred_check_branch
      %42 = sbr.rel (0) target = $region33
    $region32: #{tpu_custom_call.1} parent=1 // pred_region
      %s44 = ssub.s32 1024, 1024
      %45 = vsyncadd [#allocation6], %s44
      %s46 = sshll.u32 [#allocation5], 4
      %s47 = int_to_ptr.vmem [resolvable:$true] %s46
      %52 = dma.hbm_to_vmem [thread:$0]  %s7, 1024, %s47, [#allocation6], 128, 128, 8
    $region33: #{tpu_custom_call.1} parent=1 // pred_fallthru
      _
    // Predicated region
    $region34: #{tpu_custom_call.1} parent=1 // pred_check
      _
    $region35: #{tpu_custom_call.1} parent=1 // pred_check_branch
      %54 = sbr.rel (0) target = $region37
    $region36: #{tpu_custom_call.1} parent=1 // pred_region
      _
    $region37: #{tpu_custom_call.1} parent=1 // pred_fallthru
      _
    // Predicated region
    $region38: #{tpu_custom_call.1} parent=1 // pred_check
      _
    $region39: #{tpu_custom_call.1} parent=1 // pred_check_branch
      %56 = sbr.rel (0) target = $region41
    $region40: #{tpu_custom_call.1} parent=1 // pred_region
      %57 = dma.done [#allocation3], 1024
    $region41: #{tpu_custom_call.1} parent=1 // pred_fallthru
      _
    // Predicated region
    $region42: #{tpu_custom_call.1} parent=1 // pred_check
      _
    $region43: #{tpu_custom_call.1} parent=1 // pred_check_branch
      %59 = sbr.rel (0) target = $region45
    $region44: #{tpu_custom_call.1} parent=1 // pred_region
      %60 = dma.done [#allocation6], 1024
    $region45: #{tpu_custom_call.1} parent=1 // pred_fallthru
      _
    %v61 = vld [vmem:[%s0] sm:$0xff]
    %v62 = vld [vmem:[%s0 + $0x8] sm:$0xff]
    %v63 = vld [vmem:[%s0 + $0x10] sm:$0xff]
    %v64 = vld [vmem:[%s0 + $0x18] sm:$0xff]
    %v65 = vld [vmem:[%s0 + $0x20] sm:$0xff]
    %v66 = vld [vmem:[%s0 + $0x28] sm:$0xff]
    %v67 = vld [vmem:[%s0 + $0x30] sm:$0xff]
    %v68 = vld [vmem:[%s0 + $0x38] sm:$0xff]
    %v69 = vld [vmem:[#allocation2] sm:$0xff]
    %v70 = vld [vmem:[#allocation2 + $0x8] sm:$0xff]
    %v71 = vld [vmem:[#allocation2 + $0x10] sm:$0xff]
    %v72 = vld [vmem:[#allocation2 + $0x18] sm:$0xff]
    %v73 = vld [vmem:[#allocation2 + $0x20] sm:$0xff]
    %v74 = vld [vmem:[#allocation2 + $0x28] sm:$0xff]
    %v75 = vld [vmem:[#allocation2 + $0x30] sm:$0xff]
    %v76 = vld [vmem:[#allocation2 + $0x38] sm:$0xff]
    %v77 = vld [vmem:[%s3] sm:$0x3]
    %v79 = vlaneseq
    %v80 = vshrl.u32 %v79, 7
    %v81 = vsub.s32 0, %v80
    %v82 = vrot.slane %v77, %v81
    %v83 = vlaneseq
    %v84 = vshrl.u32 %v83, 7
    %v85 = vsub.s32 1, %v84
    %v86 = vrot.slane %v77, %v85
    %vm89 = vcmask 261120
    %v91 = vsel %vm89, %v61, 0
    %v94 = vsel %vm89, %v62, 0
    %v97 = vsel %vm89, %v63, 0
    %v100 = vsel %vm89, %v64, 0
    %v103 = vsel %vm89, %v65, 0
    %v106 = vsel %vm89, %v66, 0
    %v109 = vsel %vm89, %v67, 0
    %v112 = vsel %vm89, %v68, 0
    %114 = vmatprep.subr.mxu0 %v70
    %115 = vmatpush1.msra.mxu0 %v69
    %116 = vmatprep.subr.mxu0 %v72
    %117 = vmatpush1.msra.mxu0 %v71
    %118 = vmatprep.subr.mxu0 %v74
    %119 = vmatpush1.msra.mxu0 %v73
    %120 = vmatprep.subr.mxu0 %v76
    %121 = vmatpush1.msra.mxu0 %v75
    %122 = vmatprep.subr.mxu0 0.0
    %123 = vmatpush1.msra.mxu0 0.0
    %124 = vmatprep.subr.mxu0 0.0
    %125 = vmatpush1.msra.mxu0 0.0
    %126 = vmatprep.subr.mxu0 0.0
    %127 = vmatpush1.msra.mxu0 0.0
    %128 = vmatprep.subr.mxu0 0.0
    %129 = vmatpush1.msra.mxu0 0.0
    %130 = vmatprep.subr.mxu0 0.0
    %131 = vmatpush1.msra.mxu0 0.0
    %132 = vmatprep.subr.mxu0 0.0
    %133 = vmatpush1.msra.mxu0 0.0
    %134 = vmatprep.subr.mxu0 0.0
    %135 = vmatpush1.msra.mxu0 0.0
    %136 = vmatprep.subr.mxu0 0.0
    %137 = vmatpush1.msra.mxu0 0.0
    %138 = vmatprep.subr.mxu0 0.0
    %139 = vmatpush1.msra.mxu0 0.0
    %140 = vmatprep.subr.mxu0 0.0
    %141 = vmatpush1.msra.mxu0 0.0
    %142 = vmatprep.subr.mxu0 0.0
    %143 = vmatpush1.msra.mxu0 0.0
    %144 = vmatprep.subr.mxu0 0.0
    %145 = vmatpush1.msra.mxu0 0.0
    %146 = vmatprep.subr.mxu0 0.0
    %147 = vmatpush1.msra.mxu0 0.0
    %148 = vmatprep.subr.mxu0 0.0
    %149 = vmatpush1.msra.mxu0 0.0
    %150 = vmatprep.subr.mxu0 0.0
    %151 = vmatpush1.msra.mxu0 0.0
    %152 = vmatprep.subr.mxu0 0.0
    %153 = vmatpush1.msra.mxu0 0.0
    %154 = vmatprep.subr.mxu0 0.0
    %155 = vmatpush1.msra.mxu0 0.0
    %156 = vmatprep.subr.mxu0 0.0
    %157 = vmatpush1.msra.mxu0 0.0
    %158 = vmatprep.subr.mxu0 0.0
    %159 = vmatpush1.msra.mxu0 0.0
    %160 = vmatprep.subr.mxu0 0.0
    %161 = vmatpush1.msra.mxu0 0.0
    %162 = vmatprep.subr.mxu0 0.0
    %163 = vmatpush1.msra.mxu0 0.0
    %164 = vmatprep.subr.mxu0 0.0
    %165 = vmatpush1.msra.mxu0 0.0
    %166 = vmatprep.subr.mxu0 0.0
    %167 = vmatpush1.msra.mxu0 0.0
    %168 = vmatprep.subr.mxu0 0.0
    %169 = vmatpush1.msra.mxu0 0.0
    %170 = vmatprep.subr.mxu0 0.0
    %171 = vmatpush1.msra.mxu0 0.0
    %172 = vmatprep.subr.mxu0 0.0
    %173 = vmatpush1.msra.mxu0 0.0
    %174 = vmatprep.subr.mxu0 0.0
    %175 = vmatpush1.msra.mxu0 0.0
    %176 = vmatprep.subr.mxu0 0.0
    %177 = vmatpush1.msra.mxu0 0.0
    %178 = vmatprep.mubr.f32.mxu0 0.0
    %179 = vmatmul.mubr.f32.gmra.mrb[0].mxu0 %v91
    %v180 = vpop.f32.mrb[0].mxu0
    %v181 = vadd.f32 %v82, %v180
    %v182 = vpop.f32.mrb[0].mxu0
    %v183 = vadd.f32 %v86, %v182
    %184 = vmatprep.mubr.f32.mxu0 0.0
    %185 = vmatmul.mubr.f32.gmra.mrb[0].mxu0 %v94
    %v186 = vpop.f32.mrb[0].mxu0
    %v187 = vadd.f32 %v82, %v186
    %v188 = vpop.f32.mrb[0].mxu0
    %v189 = vadd.f32 %v86, %v188
    %190 = vmatprep.mubr.f32.mxu0 0.0
    %191 = vmatmul.mubr.f32.gmra.mrb[0].mxu0 %v97
    %v192 = vpop.f32.mrb[0].mxu0
    %v193 = vadd.f32 %v82, %v192
    %v194 = vpop.f32.mrb[0].mxu0
    %v195 = vadd.f32 %v86, %v194
    %196 = vmatprep.mubr.f32.mxu0 0.0
    %197 = vmatmul.mubr.f32.gmra.mrb[0].mxu0 %v100
    %v198 = vpop.f32.mrb[0].mxu0
    %v199 = vadd.f32 %v82, %v198
    %v200 = vpop.f32.mrb[0].mxu0
    %v201 = vadd.f32 %v86, %v200
    %202 = vmatprep.mubr.f32.mxu0 0.0
    %203 = vmatmul.mubr.f32.gmra.mrb[0].mxu0 %v103
    %v204 = vpop.f32.mrb[0].mxu0
    %v205 = vadd.f32 %v82, %v204
    %v206 = vpop.f32.mrb[0].mxu0
    %v207 = vadd.f32 %v86, %v206
    %208 = vmatprep.mubr.f32.mxu0 0.0
    %209 = vmatmul.mubr.f32.gmra.mrb[0].mxu0 %v106
    %v210 = vpop.f32.mrb[0].mxu0
    %v211 = vadd.f32 %v82, %v210
    %v212 = vpop.f32.mrb[0].mxu0
    %v213 = vadd.f32 %v86, %v212
    %214 = vmatprep.mubr.f32.mxu0 0.0
    %215 = vmatmul.mubr.f32.gmra.mrb[0].mxu0 %v109
    %v216 = vpop.f32.mrb[0].mxu0
    %v217 = vadd.f32 %v82, %v216
    %v218 = vpop.f32.mrb[0].mxu0
    %v219 = vadd.f32 %v86, %v218
    %220 = vmatprep.mubr.f32.mxu0 0.0
    %221 = vmatmul.mubr.f32.gmra.mrb[0].mxu0 %v112
    %v222 = vpop.f32.mrb[0].mxu0
    %v223 = vadd.f32 %v82, %v222
    %v224 = vpop.f32.mrb[0].mxu0
    %v225 = vadd.f32 %v86, %v224
    %226 = vdwg.mxu0
    %v227 = vld [vmem:[%s4] sm:$0xff]
    %v228 = vld [vmem:[%s4 + $0x8] sm:$0xff]
    %v229 = vld [vmem:[%s4 + $0x10] sm:$0xff]
    %v230 = vld [vmem:[%s4 + $0x18] sm:$0xff]
    %v231 = vld [vmem:[%s4 + $0x20] sm:$0xff]
    %v232 = vld [vmem:[%s4 + $0x28] sm:$0xff]
    %v233 = vld [vmem:[%s4 + $0x30] sm:$0xff]
    %v234 = vld [vmem:[%s4 + $0x38] sm:$0xff]
    %v235 = vld [vmem:[%s4 + $0x40] sm:$0xff]
    %v236 = vld [vmem:[%s4 + $0x48] sm:$0xff]
    %v237 = vld [vmem:[%s4 + $0x50] sm:$0xff]
    %v238 = vld [vmem:[%s4 + $0x58] sm:$0xff]
    %v239 = vld [vmem:[%s4 + $0x60] sm:$0xff]
    %v240 = vld [vmem:[%s4 + $0x68] sm:$0xff]
    %v241 = vld [vmem:[%s4 + $0x70] sm:$0xff]
    %v242 = vld [vmem:[%s4 + $0x78] sm:$0xff]
    %vm243 = vcmask 523264
    %v245 = vsel %vm243, 0.0, 0
    %247 = vmatprep.subr.mxu0 %v228
    %248 = vmatpush1.msra.mxu0 %v227
    %249 = vmatprep.subr.mxu0 %v230
    %250 = vmatpush1.msra.mxu0 %v229
    %251 = vmatprep.subr.mxu0 %v232
    %252 = vmatpush1.msra.mxu0 %v231
    %253 = vmatprep.subr.mxu0 %v234
    %254 = vmatpush1.msra.mxu0 %v233
    %255 = vmatprep.subr.mxu0 %v236
    %256 = vmatpush1.msra.mxu0 %v235
    %257 = vmatprep.subr.mxu0 %v238
    %258 = vmatpush1.msra.mxu0 %v237
    %259 = vmatprep.subr.mxu0 %v240
    %260 = vmatpush1.msra.mxu0 %v239
    %261 = vmatprep.subr.mxu0 %v242
    %262 = vmatpush1.msra.mxu0 %v241
    %263 = vmatprep.subr.mxu0 0.0
    %264 = vmatpush1.msra.mxu0 0.0
    %265 = vmatprep.subr.mxu0 0.0
    %266 = vmatpush1.msra.mxu0 0.0
    %267 = vmatprep.subr.mxu0 0.0
    %268 = vmatpush1.msra.mxu0 0.0
    %269 = vmatprep.subr.mxu0 0.0
    %270 = vmatpush1.msra.mxu0 0.0
    %271 = vmatprep.subr.mxu0 0.0
    %272 = vmatpush1.msra.mxu0 0.0
    %273 = vmatprep.subr.mxu0 0.0
    %274 = vmatpush1.msra.mxu0 0.0
    %275 = vmatprep.subr.mxu0 0.0
    %276 = vmatpush1.msra.mxu0 0.0
    %277 = vmatprep.subr.mxu0 0.0
    %278 = vmatpush1.msra.mxu0 0.0
    %279 = vmatprep.subr.mxu0 0.0
    %280 = vmatpush1.msra.mxu0 0.0
    %281 = vmatprep.subr.mxu0 0.0
    %282 = vmatpush1.msra.mxu0 0.0
    %283 = vmatprep.subr.mxu0 0.0
    %284 = vmatpush1.msra.mxu0 0.0
    %285 = vmatprep.subr.mxu0 0.0
    %286 = vmatpush1.msra.mxu0 0.0
    %287 = vmatprep.subr.mxu0 0.0
    %288 = vmatpush1.msra.mxu0 0.0
    %289 = vmatprep.subr.mxu0 0.0
    %290 = vmatpush1.msra.mxu0 0.0
    %291 = vmatprep.subr.mxu0 0.0
    %292 = vmatpush1.msra.mxu0 0.0
    %293 = vmatprep.subr.mxu0 0.0
    %294 = vmatpush1.msra.mxu0 0.0
    %295 = vmatprep.subr.mxu0 0.0
    %296 = vmatpush1.msra.mxu0 0.0
    %297 = vmatprep.subr.mxu0 0.0
    %298 = vmatpush1.msra.mxu0 0.0
    %299 = vmatprep.subr.mxu0 0.0
    %300 = vmatpush1.msra.mxu0 0.0
    %301 = vmatprep.subr.mxu0 0.0
    %302 = vmatpush1.msra.mxu0 0.0
    %303 = vmatprep.subr.mxu0 0.0
    %304 = vmatpush1.msra.mxu0 0.0
    %305 = vmatprep.subr.mxu0 0.0
    %306 = vmatpush1.msra.mxu0 0.0
    %307 = vmatprep.subr.mxu0 0.0
    %308 = vmatpush1.msra.mxu0 0.0
    %309 = vmatprep.subr.mxu0 0.0
    %310 = vmatpush1.msra.mxu0 0.0
    %311 = vmatprep.mubr.f32.mxu0 0.0
    %312 = vmatmul.mubr.f32.gmra.mrb[0].mxu0 %v245
    %v313 = vpop.f32.mrb[0].mxu0
    %v314 = vadd.f32 0.0, %v313
    %v315 = vpop.f32.mrb[0].mxu0
    %v316 = vadd.f32 0.0, %v315
    %317 = vdwg.mxu0
    %v318 = vadd.f32 %v181, %v314
    %v319 = vadd.f32 %v183, %v316
    %v320 = vxor.u32 %v318, 2147483648
    %v321 = vxor.u32 %v319, 2147483648
    %v322 = vmul.f32 %v320, 1.442695
    %v323 = vpow.pop %v322
    %v324 = vmul.f32 %v321, 1.442695
    %v325 = vpow.pop %v324
    %v326 = vadd.f32 %v323, 1.0
    %v327 = vadd.f32 %v325, 1.0
    %v328 = vrcp.pop %v326
    %v329 = vmul.f32 1.0, %v328
    %v330 = vrcp.pop %v327
    %v331 = vmul.f32 1.0, %v330
    %v332 = vtanh.pop %v319
    %v333 = vmul.f32 %v329, 0.0
    %335 = vrot.lane.b32.xlu0 %v332, 64
    %v336 = vpop.permute.xlu0 %335
    %v338 = vmul.f32 %v329, %v336
    %340 = vrot.lane.b32.xlu0 %v338, 64
    %v341 = vpop.permute.xlu0 %340
    %v343 = vadd.f32 %v333, %v341
    %v344 = vtanh.pop %v343
    %346 = vrot.lane.b32.xlu0 %v344, 64
    %v347 = vpop.permute.xlu0 %346
    %v349 = vmul.f32 %v331, %v347
    %v351 = vsel %vm243, %v349, 0
    %353 = vmatprep.subr.mxu0 %v228
    %354 = vmatpush1.msra.mxu0 %v227
    %355 = vmatprep.subr.mxu0 %v230
    %356 = vmatpush1.msra.mxu0 %v229
    %357 = vmatprep.subr.mxu0 %v232
    %358 = vmatpush1.msra.mxu0 %v231
    %359 = vmatprep.subr.mxu0 %v234
    %360 = vmatpush1.msra.mxu0 %v233
    %361 = vmatprep.subr.mxu0 %v236
    %362 = vmatpush1.msra.mxu0 %v235
    %363 = vmatprep.subr.mxu0 %v238
    %364 = vmatpush1.msra.mxu0 %v237
    %365 = vmatprep.subr.mxu0 %v240
    %366 = vmatpush1.msra.mxu0 %v239
    %367 = vmatprep.subr.mxu0 %v242
    %368 = vmatpush1.msra.mxu0 %v241
    %369 = vmatprep.subr.mxu0 0.0
    %370 = vmatpush1.msra.mxu0 0.0
    %371 = vmatprep.subr.mxu0 0.0
    %372 = vmatpush1.msra.mxu0 0.0
    %373 = vmatprep.subr.mxu0 0.0
    %374 = vmatpush1.msra.mxu0 0.0
    %375 = vmatprep.subr.mxu0 0.0
    %376 = vmatpush1.msra.mxu0 0.0
    %377 = vmatprep.subr.mxu0 0.0
    %378 = vmatpush1.msra.mxu0 0.0
    %379 = vmatprep.subr.mxu0 0.0
    %380 = vmatpush1.msra.mxu0 0.0
    %381 = vmatprep.subr.mxu0 0.0
    %382 = vmatpush1.msra.mxu0 0.0
    %383 = vmatprep.subr.mxu0 0.0
    %384 = vmatpush1.msra.mxu0 0.0
    %385 = vmatprep.subr.mxu0 0.0
    %386 = vmatpush1.msra.mxu0 0.0
    %387 = vmatprep.subr.mxu0 0.0
    %388 = vmatpush1.msra.mxu0 0.0
    %389 = vmatprep.subr.mxu0 0.0
    %390 = vmatpush1.msra.mxu0 0.0
    %391 = vmatprep.subr.mxu0 0.0
    %392 = vmatpush1.msra.mxu0 0.0
    %393 = vmatprep.subr.mxu0 0.0
    %394 = vmatpush1.msra.mxu0 0.0
    %395 = vmatprep.subr.mxu0 0.0
    %396 = vmatpush1.msra.mxu0 0.0
    %397 = vmatprep.subr.mxu0 0.0
    %398 = vmatpush1.msra.mxu0 0.0
    %399 = vmatprep.subr.mxu0 0.0
    %400 = vmatpush1.msra.mxu0 0.0
    %401 = vmatprep.subr.mxu0 0.0
    %402 = vmatpush1.msra.mxu0 0.0
    %403 = vmatprep.subr.mxu0 0.0
    %404 = vmatpush1.msra.mxu0 0.0
    %405 = vmatprep.subr.mxu0 0.0
    %406 = vmatpush1.msra.mxu0 0.0
    %407 = vmatprep.subr.mxu0 0.0
    %408 = vmatpush1.msra.mxu0 0.0
    %409 = vmatprep.subr.mxu0 0.0
    %410 = vmatpush1.msra.mxu0 0.0
    %411 = vmatprep.subr.mxu0 0.0
    %412 = vmatpush1.msra.mxu0 0.0
    %413 = vmatprep.subr.mxu0 0.0
    %414 = vmatpush1.msra.mxu0 0.0
    %415 = vmatprep.subr.mxu0 0.0
    %416 = vmatpush1.msra.mxu0 0.0
    %417 = vmatprep.mubr.f32.mxu0 0.0
    %418 = vmatmul.mubr.f32.gmra.mrb[0].mxu0 %v351
    %v419 = vpop.f32.mrb[0].mxu0
    %v420 = vadd.f32 0.0, %v419
    %v421 = vpop.f32.mrb[0].mxu0
    %v422 = vadd.f32 0.0, %v421
    %423 = vdwg.mxu0
    %v424 = vadd.f32 %v187, %v420
    %v425 = vadd.f32 %v189, %v422
    %v426 = vxor.u32 %v424, 2147483648
    %v427 = vxor.u32 %v425, 2147483648
    %v428 = vmul.f32 %v426, 1.442695
    %v429 = vpow.pop %v428
    %v430 = vmul.f32 %v427, 1.442695
    %v431 = vpow.pop %v430
    %v432 = vadd.f32 %v429, 1.0
    %v433 = vadd.f32 %v431, 1.0
    %v434 = vrcp.pop %v432
    %v435 = vmul.f32 1.0, %v434
    %v436 = vrcp.pop %v433
    %v437 = vmul.f32 1.0, %v436
    %v438 = vtanh.pop %v425
    %v439 = vmul.f32 %v435, %v343
    %441 = vrot.lane.b32.xlu0 %v438, 64
    %v442 = vpop.permute.xlu0 %441
    %v444 = vmul.f32 %v435, %v442
    %446 = vrot.lane.b32.xlu0 %v444, 64
    %v447 = vpop.permute.xlu0 %446
    %v449 = vadd.f32 %v439, %v447
    %v450 = vtanh.pop %v449
    %452 = vrot.lane.b32.xlu0 %v450, 64
    %v453 = vpop.permute.xlu0 %452
    %v455 = vmul.f32 %v437, %v453
    %v457 = vsel %vm243, %v455, 0
    %459 = vmatprep.subr.mxu0 %v228
    %460 = vmatpush1.msra.mxu0 %v227
    %461 = vmatprep.subr.mxu0 %v230
    %462 = vmatpush1.msra.mxu0 %v229
    %463 = vmatprep.subr.mxu0 %v232
    %464 = vmatpush1.msra.mxu0 %v231
    %465 = vmatprep.subr.mxu0 %v234
    %466 = vmatpush1.msra.mxu0 %v233
    %467 = vmatprep.subr.mxu0 %v236
    %468 = vmatpush1.msra.mxu0 %v235
    %469 = vmatprep.subr.mxu0 %v238
    %470 = vmatpush1.msra.mxu0 %v237
    %471 = vmatprep.subr.mxu0 %v240
    %472 = vmatpush1.msra.mxu0 %v239
    %473 = vmatprep.subr.mxu0 %v242
    %474 = vmatpush1.msra.mxu0 %v241
    %475 = vmatprep.subr.mxu0 0.0
    %476 = vmatpush1.msra.mxu0 0.0
    %477 = vmatprep.subr.mxu0 0.0
    %478 = vmatpush1.msra.mxu0 0.0
    %479 = vmatprep.subr.mxu0 0.0
    %480 = vmatpush1.msra.mxu0 0.0
    %481 = vmatprep.subr.mxu0 0.0
    %482 = vmatpush1.msra.mxu0 0.0
    %483 = vmatprep.subr.mxu0 0.0
    %484 = vmatpush1.msra.mxu0 0.0
    %485 = vmatprep.subr.mxu0 0.0
    %486 = vmatpush1.msra.mxu0 0.0
    %487 = vmatprep.subr.mxu0 0.0
    %488 = vmatpush1.msra.mxu0 0.0
    %489 = vmatprep.subr.mxu0 0.0
    %490 = vmatpush1.msra.mxu0 0.0
    %491 = vmatprep.subr.mxu0 0.0
    %492 = vmatpush1.msra.mxu0 0.0
    %493 = vmatprep.subr.mxu0 0.0
    %494 = vmatpush1.msra.mxu0 0.0
    %495 = vmatprep.subr.mxu0 0.0
    %496 = vmatpush1.msra.mxu0 0.0
    %497 = vmatprep.subr.mxu0 0.0
    %498 = vmatpush1.msra.mxu0 0.0
    %499 = vmatprep.subr.mxu0 0.0
    %500 = vmatpush1.msra.mxu0 0.0
    %501 = vmatprep.subr.mxu0 0.0
    %502 = vmatpush1.msra.mxu0 0.0
    %503 = vmatprep.subr.mxu0 0.0
    %504 = vmatpush1.msra.mxu0 0.0
    %505 = vmatprep.subr.mxu0 0.0
    %506 = vmatpush1.msra.mxu0 0.0
    %507 = vmatprep.subr.mxu0 0.0
    %508 = vmatpush1.msra.mxu0 0.0
    %509 = vmatprep.subr.mxu0 0.0
    %510 = vmatpush1.msra.mxu0 0.0
    %511 = vmatprep.subr.mxu0 0.0
    %512 = vmatpush1.msra.mxu0 0.0
    %513 = vmatprep.subr.mxu0 0.0
    %514 = vmatpush1.msra.mxu0 0.0
    %515 = vmatprep.subr.mxu0 0.0
    %516 = vmatpush1.msra.mxu0 0.0
    %517 = vmatprep.subr.mxu0 0.0
    %518 = vmatpush1.msra.mxu0 0.0
    %519 = vmatprep.subr.mxu0 0.0
    %520 = vmatpush1.msra.mxu0 0.0
    %521 = vmatprep.subr.mxu0 0.0
    %522 = vmatpush1.msra.mxu0 0.0
    %523 = vmatprep.mubr.f32.mxu0 0.0
    %524 = vmatmul.mubr.f32.gmra.mrb[0].mxu0 %v457
    %v525 = vpop.f32.mrb[0].mxu0
    %v526 = vadd.f32 0.0, %v525
    %v527 = vpop.f32.mrb[0].mxu0
    %v528 = vadd.f32 0.0, %v527
    %529 = vdwg.mxu0
    %v530 = vadd.f32 %v193, %v526
    %v531 = vadd.f32 %v195, %v528
    %v532 = vxor.u32 %v530, 2147483648
    %v533 = vxor.u32 %v531, 2147483648
    %v534 = vmul.f32 %v532, 1.442695
    %v535 = vpow.pop %v534
    %v536 = vmul.f32 %v533, 1.442695
    %v537 = vpow.pop %v536
    %v538 = vadd.f32 %v535, 1.0
    %v539 = vadd.f32 %v537, 1.0
    %v540 = vrcp.pop %v538
    %v541 = vmul.f32 1.0, %v540
    %v542 = vrcp.pop %v539
    %v543 = vmul.f32 1.0, %v542
    %v544 = vtanh.pop %v531
    %v545 = vmul.f32 %v541, %v449
    %547 = vrot.lane.b32.xlu0 %v544, 64
    %v548 = vpop.permute.xlu0 %547
    %v550 = vmul.f32 %v541, %v548
    %552 = vrot.lane.b32.xlu0 %v550, 64
    %v553 = vpop.permute.xlu0 %552
    %v555 = vadd.f32 %v545, %v553
    %v556 = vtanh.pop %v555
    %558 = vrot.lane.b32.xlu0 %v556, 64
    %v559 = vpop.permute.xlu0 %558
    %v561 = vmul.f32 %v543, %v559
    %v563 = vsel %vm243, %v561, 0
    %565 = vmatprep.subr.mxu0 %v228
    %566 = vmatpush1.msra.mxu0 %v227
    %567 = vmatprep.subr.mxu0 %v230
    %568 = vmatpush1.msra.mxu0 %v229
    %569 = vmatprep.subr.mxu0 %v232
    %570 = vmatpush1.msra.mxu0 %v231
    %571 = vmatprep.subr.mxu0 %v234
    %572 = vmatpush1.msra.mxu0 %v233
    %573 = vmatprep.subr.mxu0 %v236
    %574 = vmatpush1.msra.mxu0 %v235
    %575 = vmatprep.subr.mxu0 %v238
    %576 = vmatpush1.msra.mxu0 %v237
    %577 = vmatprep.subr.mxu0 %v240
    %578 = vmatpush1.msra.mxu0 %v239
    %579 = vmatprep.subr.mxu0 %v242
    %580 = vmatpush1.msra.mxu0 %v241
    %581 = vmatprep.subr.mxu0 0.0
    %582 = vmatpush1.msra.mxu0 0.0
    %583 = vmatprep.subr.mxu0 0.0
    %584 = vmatpush1.msra.mxu0 0.0
    %585 = vmatprep.subr.mxu0 0.0
    %586 = vmatpush1.msra.mxu0 0.0
    %587 = vmatprep.subr.mxu0 0.0
    %588 = vmatpush1.msra.mxu0 0.0
    %589 = vmatprep.subr.mxu0 0.0
    %590 = vmatpush1.msra.mxu0 0.0
    %591 = vmatprep.subr.mxu0 0.0
    %592 = vmatpush1.msra.mxu0 0.0
    %593 = vmatprep.subr.mxu0 0.0
    %594 = vmatpush1.msra.mxu0 0.0
    %595 = vmatprep.subr.mxu0 0.0
    %596 = vmatpush1.msra.mxu0 0.0
    %597 = vmatprep.subr.mxu0 0.0
    %598 = vmatpush1.msra.mxu0 0.0
    %599 = vmatprep.subr.mxu0 0.0
    %600 = vmatpush1.msra.mxu0 0.0
    %601 = vmatprep.subr.mxu0 0.0
    %602 = vmatpush1.msra.mxu0 0.0
    %603 = vmatprep.subr.mxu0 0.0
    %604 = vmatpush1.msra.mxu0 0.0
    %605 = vmatprep.subr.mxu0 0.0
    %606 = vmatpush1.msra.mxu0 0.0
    %607 = vmatprep.subr.mxu0 0.0
    %608 = vmatpush1.msra.mxu0 0.0
    %609 = vmatprep.subr.mxu0 0.0
    %610 = vmatpush1.msra.mxu0 0.0
    %611 = vmatprep.subr.mxu0 0.0
    %612 = vmatpush1.msra.mxu0 0.0
    %613 = vmatprep.subr.mxu0 0.0
    %614 = vmatpush1.msra.mxu0 0.0
    %615 = vmatprep.subr.mxu0 0.0
    %616 = vmatpush1.msra.mxu0 0.0
    %617 = vmatprep.subr.mxu0 0.0
    %618 = vmatpush1.msra.mxu0 0.0
    %619 = vmatprep.subr.mxu0 0.0
    %620 = vmatpush1.msra.mxu0 0.0
    %621 = vmatprep.subr.mxu0 0.0
    %622 = vmatpush1.msra.mxu0 0.0
    %623 = vmatprep.subr.mxu0 0.0
    %624 = vmatpush1.msra.mxu0 0.0
    %625 = vmatprep.subr.mxu0 0.0
    %626 = vmatpush1.msra.mxu0 0.0
    %627 = vmatprep.subr.mxu0 0.0
    %628 = vmatpush1.msra.mxu0 0.0
    %629 = vmatprep.mubr.f32.mxu0 0.0
    %630 = vmatmul.mubr.f32.gmra.mrb[0].mxu0 %v563
    %v631 = vpop.f32.mrb[0].mxu0
    %v632 = vadd.f32 0.0, %v631
    %v633 = vpop.f32.mrb[0].mxu0
    %v634 = vadd.f32 0.0, %v633
    %635 = vdwg.mxu0
    %v636 = vadd.f32 %v199, %v632
    %v637 = vadd.f32 %v201, %v634
    %v638 = vxor.u32 %v636, 2147483648
    %v639 = vxor.u32 %v637, 2147483648
    %v640 = vmul.f32 %v638, 1.442695
    %v641 = vpow.pop %v640
    %v642 = vmul.f32 %v639, 1.442695
    %v643 = vpow.pop %v642
    %v644 = vadd.f32 %v641, 1.0
    %v645 = vadd.f32 %v643, 1.0
    %v646 = vrcp.pop %v644
    %v647 = vmul.f32 1.0, %v646
    %v648 = vrcp.pop %v645
    %v649 = vmul.f32 1.0, %v648
    %v650 = vtanh.pop %v637
    %v651 = vmul.f32 %v647, %v555
    %653 = vrot.lane.b32.xlu0 %v650, 64
    %v654 = vpop.permute.xlu0 %653
    %v656 = vmul.f32 %v647, %v654
    %658 = vrot.lane.b32.xlu0 %v656, 64
    %v659 = vpop.permute.xlu0 %658
    %v661 = vadd.f32 %v651, %v659
    %v662 = vtanh.pop %v661
    %664 = vrot.lane.b32.xlu0 %v662, 64
    %v665 = vpop.permute.xlu0 %664
    %v667 = vmul.f32 %v649, %v665
    %v669 = vsel %vm243, %v667, 0
    %671 = vmatprep.subr.mxu0 %v228
    %672 = vmatpush1.msra.mxu0 %v227
    %673 = vmatprep.subr.mxu0 %v230
    %674 = vmatpush1.msra.mxu0 %v229
    %675 = vmatprep.subr.mxu0 %v232
    %676 = vmatpush1.msra.mxu0 %v231
    %677 = vmatprep.subr.mxu0 %v234
    %678 = vmatpush1.msra.mxu0 %v233
    %679 = vmatprep.subr.mxu0 %v236
    %680 = vmatpush1.msra.mxu0 %v235
    %681 = vmatprep.subr.mxu0 %v238
    %682 = vmatpush1.msra.mxu0 %v237
    %683 = vmatprep.subr.mxu0 %v240
    %684 = vmatpush1.msra.mxu0 %v239
    %685 = vmatprep.subr.mxu0 %v242
    %686 = vmatpush1.msra.mxu0 %v241
    %687 = vmatprep.subr.mxu0 0.0
    %688 = vmatpush1.msra.mxu0 0.0
    %689 = vmatprep.subr.mxu0 0.0
    %690 = vmatpush1.msra.mxu0 0.0
    %691 = vmatprep.subr.mxu0 0.0
    %692 = vmatpush1.msra.mxu0 0.0
    %693 = vmatprep.subr.mxu0 0.0
    %694 = vmatpush1.msra.mxu0 0.0
    %695 = vmatprep.subr.mxu0 0.0
    %696 = vmatpush1.msra.mxu0 0.0
    %697 = vmatprep.subr.mxu0 0.0
    %698 = vmatpush1.msra.mxu0 0.0
    %699 = vmatprep.subr.mxu0 0.0
    %700 = vmatpush1.msra.mxu0 0.0
    %701 = vmatprep.subr.mxu0 0.0
    %702 = vmatpush1.msra.mxu0 0.0
    %703 = vmatprep.subr.mxu0 0.0
    %704 = vmatpush1.msra.mxu0 0.0
    %705 = vmatprep.subr.mxu0 0.0
    %706 = vmatpush1.msra.mxu0 0.0
    %707 = vmatprep.subr.mxu0 0.0
    %708 = vmatpush1.msra.mxu0 0.0
    %709 = vmatprep.subr.mxu0 0.0
    %710 = vmatpush1.msra.mxu0 0.0
    %711 = vmatprep.subr.mxu0 0.0
    %712 = vmatpush1.msra.mxu0 0.0
    %713 = vmatprep.subr.mxu0 0.0
    %714 = vmatpush1.msra.mxu0 0.0
    %715 = vmatprep.subr.mxu0 0.0
    %716 = vmatpush1.msra.mxu0 0.0
    %717 = vmatprep.subr.mxu0 0.0
    %718 = vmatpush1.msra.mxu0 0.0
    %719 = vmatprep.subr.mxu0 0.0
    %720 = vmatpush1.msra.mxu0 0.0
    %721 = vmatprep.subr.mxu0 0.0
    %722 = vmatpush1.msra.mxu0 0.0
    %723 = vmatprep.subr.mxu0 0.0
    %724 = vmatpush1.msra.mxu0 0.0
    %725 = vmatprep.subr.mxu0 0.0
    %726 = vmatpush1.msra.mxu0 0.0
    %727 = vmatprep.subr.mxu0 0.0
    %728 = vmatpush1.msra.mxu0 0.0
    %729 = vmatprep.subr.mxu0 0.0
    %730 = vmatpush1.msra.mxu0 0.0
    %731 = vmatprep.subr.mxu0 0.0
    %732 = vmatpush1.msra.mxu0 0.0
    %733 = vmatprep.subr.mxu0 0.0
    %734 = vmatpush1.msra.mxu0 0.0
    %735 = vmatprep.mubr.f32.mxu0 0.0
    %736 = vmatmul.mubr.f32.gmra.mrb[0].mxu0 %v669
    %v737 = vpop.f32.mrb[0].mxu0
    %v738 = vadd.f32 0.0, %v737
    %v739 = vpop.f32.mrb[0].mxu0
    %v740 = vadd.f32 0.0, %v739
    %741 = vdwg.mxu0
    %v742 = vadd.f32 %v205, %v738
    %v743 = vadd.f32 %v207, %v740
    %v744 = vxor.u32 %v742, 2147483648
    %v745 = vxor.u32 %v743, 2147483648
    %v746 = vmul.f32 %v744, 1.442695
    %v747 = vpow.pop %v746
    %v748 = vmul.f32 %v745, 1.442695
    %v749 = vpow.pop %v748
    %v750 = vadd.f32 %v747, 1.0
    %v751 = vadd.f32 %v749, 1.0
    %v752 = vrcp.pop %v750
    %v753 = vmul.f32 1.0, %v752
    %v754 = vrcp.pop %v751
    %v755 = vmul.f32 1.0, %v754
    %v756 = vtanh.pop %v743
    %v757 = vmul.f32 %v753, %v661
    %759 = vrot.lane.b32.xlu0 %v756, 64
    %v760 = vpop.permute.xlu0 %759
    %v762 = vmul.f32 %v753, %v760
    %764 = vrot.lane.b32.xlu0 %v762, 64
    %v765 = vpop.permute.xlu0 %764
    %v767 = vadd.f32 %v757, %v765
    %v768 = vtanh.pop %v767
    %770 = vrot.lane.b32.xlu0 %v768, 64
    %v771 = vpop.permute.xlu0 %770
    %v773 = vmul.f32 %v755, %v771
    %v775 = vsel %vm243, %v773, 0
    %777 = vmatprep.subr.mxu0 %v228
    %778 = vmatpush1.msra.mxu0 %v227
    %779 = vmatprep.subr.mxu0 %v230
    %780 = vmatpush1.msra.mxu0 %v229
    %781 = vmatprep.subr.mxu0 %v232
    %782 = vmatpush1.msra.mxu0 %v231
    %783 = vmatprep.subr.mxu0 %v234
    %784 = vmatpush1.msra.mxu0 %v233
    %785 = vmatprep.subr.mxu0 %v236
    %786 = vmatpush1.msra.mxu0 %v235
    %787 = vmatprep.subr.mxu0 %v238
    %788 = vmatpush1.msra.mxu0 %v237
    %789 = vmatprep.subr.mxu0 %v240
    %790 = vmatpush1.msra.mxu0 %v239
    %791 = vmatprep.subr.mxu0 %v242
    %792 = vmatpush1.msra.mxu0 %v241
    %793 = vmatprep.subr.mxu0 0.0
    %794 = vmatpush1.msra.mxu0 0.0
    %795 = vmatprep.subr.mxu0 0.0
    %796 = vmatpush1.msra.mxu0 0.0
    %797 = vmatprep.subr.mxu0 0.0
    %798 = vmatpush1.msra.mxu0 0.0
    %799 = vmatprep.subr.mxu0 0.0
    %800 = vmatpush1.msra.mxu0 0.0
    %801 = vmatprep.subr.mxu0 0.0
    %802 = vmatpush1.msra.mxu0 0.0
    %803 = vmatprep.subr.mxu0 0.0
    %804 = vmatpush1.msra.mxu0 0.0
    %805 = vmatprep.subr.mxu0 0.0
    %806 = vmatpush1.msra.mxu0 0.0
    %807 = vmatprep.subr.mxu0 0.0
    %808 = vmatpush1.msra.mxu0 0.0
    %809 = vmatprep.subr.mxu0 0.0
    %810 = vmatpush1.msra.mxu0 0.0
    %811 = vmatprep.subr.mxu0 0.0
    %812 = vmatpush1.msra.mxu0 0.0
    %813 = vmatprep.subr.mxu0 0.0
    %814 = vmatpush1.msra.mxu0 0.0
    %815 = vmatprep.subr.mxu0 0.0
    %816 = vmatpush1.msra.mxu0 0.0
    %817 = vmatprep.subr.mxu0 0.0
    %818 = vmatpush1.msra.mxu0 0.0
    %819 = vmatprep.subr.mxu0 0.0
    %820 = vmatpush1.msra.mxu0 0.0
    %821 = vmatprep.subr.mxu0 0.0
    %822 = vmatpush1.msra.mxu0 0.0
    %823 = vmatprep.subr.mxu0 0.0
    %824 = vmatpush1.msra.mxu0 0.0
    %825 = vmatprep.subr.mxu0 0.0
    %826 = vmatpush1.msra.mxu0 0.0
    %827 = vmatprep.subr.mxu0 0.0
    %828 = vmatpush1.msra.mxu0 0.0
    %829 = vmatprep.subr.mxu0 0.0
    %830 = vmatpush1.msra.mxu0 0.0
    %831 = vmatprep.subr.mxu0 0.0
    %832 = vmatpush1.msra.mxu0 0.0
    %833 = vmatprep.subr.mxu0 0.0
    %834 = vmatpush1.msra.mxu0 0.0
    %835 = vmatprep.subr.mxu0 0.0
    %836 = vmatpush1.msra.mxu0 0.0
    %837 = vmatprep.subr.mxu0 0.0
    %838 = vmatpush1.msra.mxu0 0.0
    %839 = vmatprep.subr.mxu0 0.0
    %840 = vmatpush1.msra.mxu0 0.0
    %841 = vmatprep.mubr.f32.mxu0 0.0
    %842 = vmatmul.mubr.f32.gmra.mrb[0].mxu0 %v775
    %v843 = vpop.f32.mrb[0].mxu0
    %v844 = vadd.f32 0.0, %v843
    %v845 = vpop.f32.mrb[0].mxu0
    %v846 = vadd.f32 0.0, %v845
    %847 = vdwg.mxu0
    %v848 = vadd.f32 %v211, %v844
    %v849 = vadd.f32 %v213, %v846
    %v850 = vxor.u32 %v848, 2147483648
    %v851 = vxor.u32 %v849, 2147483648
    %v852 = vmul.f32 %v850, 1.442695
    %v853 = vpow.pop %v852
    %v854 = vmul.f32 %v851, 1.442695
    %v855 = vpow.pop %v854
    %v856 = vadd.f32 %v853, 1.0
    %v857 = vadd.f32 %v855, 1.0
    %v858 = vrcp.pop %v856
    %v859 = vmul.f32 1.0, %v858
    %v860 = vrcp.pop %v857
    %v861 = vmul.f32 1.0, %v860
    %v862 = vtanh.pop %v849
    %v863 = vmul.f32 %v859, %v767
    %865 = vrot.lane.b32.xlu0 %v862, 64
    %v866 = vpop.permute.xlu0 %865
    %v868 = vmul.f32 %v859, %v866
    %870 = vrot.lane.b32.xlu0 %v868, 64
    %v871 = vpop.permute.xlu0 %870
    %v873 = vadd.f32 %v863, %v871
    %v874 = vtanh.pop %v873
    %876 = vrot.lane.b32.xlu0 %v874, 64
    %v877 = vpop.permute.xlu0 %876
    %v879 = vmul.f32 %v861, %v877
    %v881 = vsel %vm243, %v879, 0
    %883 = vmatprep.subr.mxu0 %v228
    %884 = vmatpush1.msra.mxu0 %v227
    %885 = vmatprep.subr.mxu0 %v230
    %886 = vmatpush1.msra.mxu0 %v229
    %887 = vmatprep.subr.mxu0 %v232
    %888 = vmatpush1.msra.mxu0 %v231
    %889 = vmatprep.subr.mxu0 %v234
    %890 = vmatpush1.msra.mxu0 %v233
    %891 = vmatprep.subr.mxu0 %v236
    %892 = vmatpush1.msra.mxu0 %v235
    %893 = vmatprep.subr.mxu0 %v238
    %894 = vmatpush1.msra.mxu0 %v237
    %895 = vmatprep.subr.mxu0 %v240
    %896 = vmatpush1.msra.mxu0 %v239
    %897 = vmatprep.subr.mxu0 %v242
    %898 = vmatpush1.msra.mxu0 %v241
    %899 = vmatprep.subr.mxu0 0.0
    %900 = vmatpush1.msra.mxu0 0.0
    %901 = vmatprep.subr.mxu0 0.0
    %902 = vmatpush1.msra.mxu0 0.0
    %903 = vmatprep.subr.mxu0 0.0
    %904 = vmatpush1.msra.mxu0 0.0
    %905 = vmatprep.subr.mxu0 0.0
    %906 = vmatpush1.msra.mxu0 0.0
    %907 = vmatprep.subr.mxu0 0.0
    %908 = vmatpush1.msra.mxu0 0.0
    %909 = vmatprep.subr.mxu0 0.0
    %910 = vmatpush1.msra.mxu0 0.0
    %911 = vmatprep.subr.mxu0 0.0
    %912 = vmatpush1.msra.mxu0 0.0
    %913 = vmatprep.subr.mxu0 0.0
    %914 = vmatpush1.msra.mxu0 0.0
    %915 = vmatprep.subr.mxu0 0.0
    %916 = vmatpush1.msra.mxu0 0.0
    %917 = vmatprep.subr.mxu0 0.0
    %918 = vmatpush1.msra.mxu0 0.0
    %919 = vmatprep.subr.mxu0 0.0
    %920 = vmatpush1.msra.mxu0 0.0
    %921 = vmatprep.subr.mxu0 0.0
    %922 = vmatpush1.msra.mxu0 0.0
    %923 = vmatprep.subr.mxu0 0.0
    %924 = vmatpush1.msra.mxu0 0.0
    %925 = vmatprep.subr.mxu0 0.0
    %926 = vmatpush1.msra.mxu0 0.0
    %927 = vmatprep.subr.mxu0 0.0
    %928 = vmatpush1.msra.mxu0 0.0
    %929 = vmatprep.subr.mxu0 0.0
    %930 = vmatpush1.msra.mxu0 0.0
    %931 = vmatprep.subr.mxu0 0.0
    %932 = vmatpush1.msra.mxu0 0.0
    %933 = vmatprep.subr.mxu0 0.0
    %934 = vmatpush1.msra.mxu0 0.0
    %935 = vmatprep.subr.mxu0 0.0
    %936 = vmatpush1.msra.mxu0 0.0
    %937 = vmatprep.subr.mxu0 0.0
    %938 = vmatpush1.msra.mxu0 0.0
    %939 = vmatprep.subr.mxu0 0.0
    %940 = vmatpush1.msra.mxu0 0.0
    %941 = vmatprep.subr.mxu0 0.0
    %942 = vmatpush1.msra.mxu0 0.0
    %943 = vmatprep.subr.mxu0 0.0
    %944 = vmatpush1.msra.mxu0 0.0
    %945 = vmatprep.subr.mxu0 0.0
    %946 = vmatpush1.msra.mxu0 0.0
    %947 = vmatprep.mubr.f32.mxu0 0.0
    %948 = vmatmul.mubr.f32.gmra.mrb[0].mxu0 %v881
    %v949 = vpop.f32.mrb[0].mxu0
    %v950 = vadd.f32 0.0, %v949
    %v951 = vpop.f32.mrb[0].mxu0
    %v952 = vadd.f32 0.0, %v951
    %953 = vdwg.mxu0
    %v954 = vadd.f32 %v217, %v950
    %v955 = vadd.f32 %v219, %v952
    %v956 = vxor.u32 %v954, 2147483648
    %v957 = vxor.u32 %v955, 2147483648
    %v958 = vmul.f32 %v956, 1.442695
    %v959 = vpow.pop %v958
    %v960 = vmul.f32 %v957, 1.442695
    %v961 = vpow.pop %v960
    %v962 = vadd.f32 %v959, 1.0
    %v963 = vadd.f32 %v961, 1.0
    %v964 = vrcp.pop %v962
    %v965 = vmul.f32 1.0, %v964
    %v966 = vrcp.pop %v963
    %v967 = vmul.f32 1.0, %v966
    %v968 = vtanh.pop %v955
    %v969 = vmul.f32 %v965, %v873
    %971 = vrot.lane.b32.xlu0 %v968, 64
    %v972 = vpop.permute.xlu0 %971
    %v974 = vmul.f32 %v965, %v972
    %976 = vrot.lane.b32.xlu0 %v974, 64
    %v977 = vpop.permute.xlu0 %976
    %v979 = vadd.f32 %v969, %v977
    %v980 = vtanh.pop %v979
    %982 = vrot.lane.b32.xlu0 %v980, 64
    %v983 = vpop.permute.xlu0 %982
    %v985 = vmul.f32 %v967, %v983
    %v987 = vsel %vm243, %v985, 0
    %989 = vmatprep.subr.mxu0 %v228
    %990 = vmatpush1.msra.mxu0 %v227
    %991 = vmatprep.subr.mxu0 %v230
    %992 = vmatpush1.msra.mxu0 %v229
    %993 = vmatprep.subr.mxu0 %v232
    %994 = vmatpush1.msra.mxu0 %v231
    %995 = vmatprep.subr.mxu0 %v234
    %996 = vmatpush1.msra.mxu0 %v233
    %997 = vmatprep.subr.mxu0 %v236
    %998 = vmatpush1.msra.mxu0 %v235
    %999 = vmatprep.subr.mxu0 %v238
    %1000 = vmatpush1.msra.mxu0 %v237
    %1001 = vmatprep.subr.mxu0 %v240
    %1002 = vmatpush1.msra.mxu0 %v239
    %1003 = vmatprep.subr.mxu0 %v242
    %1004 = vmatpush1.msra.mxu0 %v241
    %1005 = vmatprep.subr.mxu0 0.0
    %1006 = vmatpush1.msra.mxu0 0.0
    %1007 = vmatprep.subr.mxu0 0.0
    %1008 = vmatpush1.msra.mxu0 0.0
    %1009 = vmatprep.subr.mxu0 0.0
    %1010 = vmatpush1.msra.mxu0 0.0
    %1011 = vmatprep.subr.mxu0 0.0
    %1012 = vmatpush1.msra.mxu0 0.0
    %1013 = vmatprep.subr.mxu0 0.0
    %1014 = vmatpush1.msra.mxu0 0.0
    %1015 = vmatprep.subr.mxu0 0.0
    %1016 = vmatpush1.msra.mxu0 0.0
    %1017 = vmatprep.subr.mxu0 0.0
    %1018 = vmatpush1.msra.mxu0 0.0
    %1019 = vmatprep.subr.mxu0 0.0
    %1020 = vmatpush1.msra.mxu0 0.0
    %1021 = vmatprep.subr.mxu0 0.0
    %1022 = vmatpush1.msra.mxu0 0.0
    %1023 = vmatprep.subr.mxu0 0.0
    %1024 = vmatpush1.msra.mxu0 0.0
    %1025 = vmatprep.subr.mxu0 0.0
    %1026 = vmatpush1.msra.mxu0 0.0
    %1027 = vmatprep.subr.mxu0 0.0
    %1028 = vmatpush1.msra.mxu0 0.0
    %1029 = vmatprep.subr.mxu0 0.0
    %1030 = vmatpush1.msra.mxu0 0.0
    %1031 = vmatprep.subr.mxu0 0.0
    %1032 = vmatpush1.msra.mxu0 0.0
    %1033 = vmatprep.subr.mxu0 0.0
    %1034 = vmatpush1.msra.mxu0 0.0
    %1035 = vmatprep.subr.mxu0 0.0
    %1036 = vmatpush1.msra.mxu0 0.0
    %1037 = vmatprep.subr.mxu0 0.0
    %1038 = vmatpush1.msra.mxu0 0.0
    %1039 = vmatprep.subr.mxu0 0.0
    %1040 = vmatpush1.msra.mxu0 0.0
    %1041 = vmatprep.subr.mxu0 0.0
    %1042 = vmatpush1.msra.mxu0 0.0
    %1043 = vmatprep.subr.mxu0 0.0
    %1044 = vmatpush1.msra.mxu0 0.0
    %1045 = vmatprep.subr.mxu0 0.0
    %1046 = vmatpush1.msra.mxu0 0.0
    %1047 = vmatprep.subr.mxu0 0.0
    %1048 = vmatpush1.msra.mxu0 0.0
    %1049 = vmatprep.subr.mxu0 0.0
    %1050 = vmatpush1.msra.mxu0 0.0
    %1051 = vmatprep.subr.mxu0 0.0
    %1052 = vmatpush1.msra.mxu0 0.0
    %1053 = vmatprep.mubr.f32.mxu0 0.0
    %1054 = vmatmul.mubr.f32.gmra.mrb[0].mxu0 %v987
    %v1055 = vpop.f32.mrb[0].mxu0
    %v1056 = vadd.f32 0.0, %v1055
    %v1057 = vpop.f32.mrb[0].mxu0
    %v1058 = vadd.f32 0.0, %v1057
    %1059 = vdwg.mxu0
    %v1060 = vadd.f32 %v223, %v1056
    %v1061 = vadd.f32 %v225, %v1058
    %v1062 = vxor.u32 %v1060, 2147483648
    %v1063 = vxor.u32 %v1061, 2147483648
    %v1064 = vmul.f32 %v1062, 1.442695
    %v1065 = vpow.pop %v1064
    %v1066 = vmul.f32 %v1063, 1.442695
    %v1067 = vpow.pop %v1066
    %v1068 = vadd.f32 %v1065, 1.0
    %v1069 = vadd.f32 %v1067, 1.0
    %v1070 = vrcp.pop %v1068
    %v1071 = vmul.f32 1.0, %v1070
    %v1072 = vrcp.pop %v1069
    %v1073 = vmul.f32 1.0, %v1072
    %v1074 = vtanh.pop %v1061
    %v1075 = vmul.f32 %v1071, %v979
    %1077 = vrot.lane.b32.xlu0 %v1074, 64
    %v1078 = vpop.permute.xlu0 %1077
    %v1080 = vmul.f32 %v1071, %v1078
    %1082 = vrot.lane.b32.xlu0 %v1080, 64
    %v1083 = vpop.permute.xlu0 %1082
    %v1085 = vadd.f32 %v1075, %v1083
    %v1086 = vtanh.pop %v1085
    %1088 = vrot.lane.b32.xlu0 %v1086, 64
    %v1089 = vpop.permute.xlu0 %1088
    %v1091 = vmul.f32 %v1073, %v1089
    %v1092 = vsel %vm89, %v349, %v1091
    %v1093 = vsel %vm89, %v455, %v985
    %v1094 = vsel %vm89, %v561, %v879
    %v1095 = vsel %vm89, %v667, %v773
    %v1096 = vsel %vm89, %v773, %v667
    %v1097 = vsel %vm89, %v879, %v561
    %v1098 = vsel %vm89, %v985, %v455
    %v1099 = vsel %vm89, %v1091, %v349
    %v1100 = vld [vmem:[%s1] sm:$0xff]
    %v1101 = vld [vmem:[%s1 + $0x8] sm:$0xff]
    %v1102 = vld [vmem:[%s1 + $0x10] sm:$0xff]
    %v1103 = vld [vmem:[%s1 + $0x18] sm:$0xff]
    %v1104 = vld [vmem:[%s1 + $0x20] sm:$0xff]
    %v1105 = vld [vmem:[%s1 + $0x28] sm:$0xff]
    %v1106 = vld [vmem:[%s1 + $0x30] sm:$0xff]
    %v1107 = vld [vmem:[%s1 + $0x38] sm:$0xff]
    %1109 = vset.pattern.permute.xlu0 0
    %1110 = vperm.xlu0 %1109, %v1100
    %v1111 = vpop.permute.xlu0 %1110
    %1114 = vset.pattern.permute.xlu0 0
    %1115 = vperm.xlu0 %1114, %v1101
    %v1116 = vpop.permute.xlu0 %1115
    %1119 = vset.pattern.permute.xlu0 0
    %1120 = vperm.xlu0 %1119, %v1102
    %v1121 = vpop.permute.xlu0 %1120
    %1124 = vset.pattern.permute.xlu0 0
    %1125 = vperm.xlu0 %1124, %v1103
    %v1126 = vpop.permute.xlu0 %1125
    %1129 = vset.pattern.permute.xlu0 0
    %1130 = vperm.xlu0 %1129, %v1104
    %v1131 = vpop.permute.xlu0 %1130
    %1134 = vset.pattern.permute.xlu0 0
    %1135 = vperm.xlu0 %1134, %v1105
    %v1136 = vpop.permute.xlu0 %1135
    %1139 = vset.pattern.permute.xlu0 0
    %1140 = vperm.xlu0 %1139, %v1106
    %v1141 = vpop.permute.xlu0 %1140
    %1144 = vset.pattern.permute.xlu0 0
    %1145 = vperm.xlu0 %1144, %v1107
    %v1146 = vpop.permute.xlu0 %1145
    %v1148 = vmul.f32 %v1092, %v1111
    %v1149 = vmul.f32 %v1093, %v1116
    %v1150 = vmul.f32 %v1094, %v1121
    %v1151 = vmul.f32 %v1095, %v1126
    %v1152 = vmul.f32 %v1096, %v1131
    %v1153 = vmul.f32 %v1097, %v1136
    %v1154 = vmul.f32 %v1098, %v1141
    %v1155 = vmul.f32 %v1099, %v1146
    %v1156 = vsel %vm243, %v1148, 0.0
    %v1157 = vsel %vm243, %v1149, 0.0
    %v1158 = vadd.f32 %v1156, %v1157
    %v1159 = vsel %vm243, %v1150, 0.0
    %v1160 = vadd.f32 %v1158, %v1159
    %v1161 = vsel %vm243, %v1151, 0.0
    %v1162 = vadd.f32 %v1160, %v1161
    %v1163 = vsel %vm243, %v1152, 0.0
    %v1164 = vadd.f32 %v1162, %v1163
    %v1165 = vsel %vm243, %v1153, 0.0
    %v1166 = vadd.f32 %v1164, %v1165
    %v1167 = vsel %vm243, %v1154, 0.0
    %v1168 = vadd.f32 %v1166, %v1167
    %v1169 = vsel %vm243, %v1155, 0.0
    %v1170 = vadd.f32 %v1168, %v1169
    %v1171 = vrot.slane %v1170, 4
    %v1172 = vadd.f32 %v1170, %v1171
    %v1173 = vrot.slane %v1172, 2
    %v1174 = vadd.f32 %v1172, %v1173
    %v1175 = vrot.slane %v1174, 1
    %v1176 = vadd.f32 %v1174, %v1175
    %v1177 = vmul.f32 %v1176, 0.0625
    %v1178 = vsub.f32 %v1092, %v1177
    %v1179 = vsub.f32 %v1093, %v1177
    %v1180 = vsub.f32 %v1094, %v1177
    %v1181 = vsub.f32 %v1095, %v1177
    %v1182 = vsub.f32 %v1096, %v1177
    %v1183 = vsub.f32 %v1097, %v1177
    %v1184 = vsub.f32 %v1098, %v1177
    %v1185 = vsub.f32 %v1099, %v1177
    %v1186 = vmul.f32 %v1178, %v1111
    %v1187 = vmul.f32 %v1179, %v1116
    %v1188 = vmul.f32 %v1180, %v1121
    %v1189 = vmul.f32 %v1181, %v1126
    %v1190 = vmul.f32 %v1182, %v1131
    %v1191 = vmul.f32 %v1183, %v1136
    %v1192 = vmul.f32 %v1184, %v1141
    %v1193 = vmul.f32 %v1185, %v1146
    %v1194 = vmul.f32 %v1186, %v1186
    %v1195 = vmul.f32 %v1187, %v1187
    %v1196 = vmul.f32 %v1188, %v1188
    %v1197 = vmul.f32 %v1189, %v1189
    %v1198 = vmul.f32 %v1190, %v1190
    %v1199 = vmul.f32 %v1191, %v1191
    %v1200 = vmul.f32 %v1192, %v1192
    %v1201 = vmul.f32 %v1193, %v1193
    %v1202 = vsel %vm243, %v1194, 0.0
    %v1203 = vsel %vm243, %v1195, 0.0
    %v1204 = vadd.f32 %v1202, %v1203
    %v1205 = vsel %vm243, %v1196, 0.0
    %v1206 = vadd.f32 %v1204, %v1205
    %v1207 = vsel %vm243, %v1197, 0.0
    %v1208 = vadd.f32 %v1206, %v1207
    %v1209 = vsel %vm243, %v1198, 0.0
    %v1210 = vadd.f32 %v1208, %v1209
    %v1211 = vsel %vm243, %v1199, 0.0
    %v1212 = vadd.f32 %v1210, %v1211
    %v1213 = vsel %vm243, %v1200, 0.0
    %v1214 = vadd.f32 %v1212, %v1213
    %v1215 = vsel %vm243, %v1201, 0.0
    %v1216 = vadd.f32 %v1214, %v1215
    %v1217 = vrot.slane %v1216, 4
    %v1218 = vadd.f32 %v1216, %v1217
    %v1219 = vrot.slane %v1218, 2
    %v1220 = vadd.f32 %v1218, %v1219
    %v1221 = vrot.slane %v1220, 1
    %v1222 = vadd.f32 %v1220, %v1221
    %v1223 = vmul.f32 %v1222, 0.0625
    %v1224 = vadd.f32 %v1223, 1e-05
    %v1225 = vrsqrt.pop %v1224
    %v1226 = vmul.f32 %v1178, %v1225
    %v1227 = vmul.f32 %v1179, %v1225
    %v1228 = vmul.f32 %v1180, %v1225
    %v1229 = vmul.f32 %v1181, %v1225
    %v1230 = vmul.f32 %v1182, %v1225
    %v1231 = vmul.f32 %v1183, %v1225
    %v1232 = vmul.f32 %v1184, %v1225
    %v1233 = vmul.f32 %v1185, %v1225
    %v1234 = vld [vmem:[%s5] sm:$0x1]
    %v1236 = vlaneseq
    %v1237 = vshrl.u32 %v1236, 7
    %v1238 = vsub.s32 0, %v1237
    %v1239 = vrot.slane %v1234, %v1238
    %v1241 = vmul.f32 %v1226, %v1239
    %v1242 = vmul.f32 %v1227, %v1239
    %v1243 = vmul.f32 %v1228, %v1239
    %v1244 = vmul.f32 %v1229, %v1239
    %v1245 = vmul.f32 %v1230, %v1239
    %v1246 = vmul.f32 %v1231, %v1239
    %v1247 = vmul.f32 %v1232, %v1239
    %v1248 = vmul.f32 %v1233, %v1239
    %v1249 = vld [vmem:[%s6] sm:$0x1]
    %v1251 = vlaneseq
    %v1252 = vshrl.u32 %v1251, 7
    %v1253 = vsub.s32 0, %v1252
    %v1254 = vrot.slane %v1249, %v1253
    %v1256 = vadd.f32 %v1241, %v1254
    %v1257 = vadd.f32 %v1242, %v1254
    %v1258 = vadd.f32 %v1243, %v1254
    %v1259 = vadd.f32 %v1244, %v1254
    %v1260 = vadd.f32 %v1245, %v1254
    %v1261 = vadd.f32 %v1246, %v1254
    %v1262 = vadd.f32 %v1247, %v1254
    %v1263 = vadd.f32 %v1248, %v1254
    %v1264 = vld [vmem:[#allocation5] sm:$0xff]
    %v1265 = vld [vmem:[#allocation5 + $0x8] sm:$0xff]
    %v1266 = vld [vmem:[#allocation5 + $0x10] sm:$0xff]
    %v1267 = vld [vmem:[#allocation5 + $0x18] sm:$0xff]
    %v1268 = vld [vmem:[#allocation5 + $0x20] sm:$0xff]
    %v1269 = vld [vmem:[#allocation5 + $0x28] sm:$0xff]
    %v1270 = vld [vmem:[#allocation5 + $0x30] sm:$0xff]
    %v1271 = vld [vmem:[#allocation5 + $0x38] sm:$0xff]
    %v1272 = vld [vmem:[%s8] sm:$0x1]
    %v1274 = vlaneseq
    %v1275 = vshrl.u32 %v1274, 7
    %v1276 = vsub.s32 0, %v1275
    %v1277 = vrot.slane %v1272, %v1276
    %v1280 = vsel %vm243, %v1256, 0
    %v1283 = vsel %vm243, %v1257, 0
    %v1286 = vsel %vm243, %v1258, 0
    %v1289 = vsel %vm243, %v1259, 0
    %v1292 = vsel %vm243, %v1260, 0
    %v1295 = vsel %vm243, %v1261, 0
    %v1298 = vsel %vm243, %v1262, 0
    %v1301 = vsel %vm243, %v1263, 0
    %1303 = vmatprep.subr.mxu0 0.0
    %1304 = vmatpush1.msra.mxu0 %v1264
    %1305 = vmatprep.subr.mxu0 0.0
    %1306 = vmatpush1.msra.mxu0 %v1265
    %1307 = vmatprep.subr.mxu0 0.0
    %1308 = vmatpush1.msra.mxu0 %v1266
    %1309 = vmatprep.subr.mxu0 0.0
    %1310 = vmatpush1.msra.mxu0 %v1267
    %1311 = vmatprep.subr.mxu0 0.0
    %1312 = vmatpush1.msra.mxu0 %v1268
    %1313 = vmatprep.subr.mxu0 0.0
    %1314 = vmatpush1.msra.mxu0 %v1269
    %1315 = vmatprep.subr.mxu0 0.0
    %1316 = vmatpush1.msra.mxu0 %v1270
    %1317 = vmatprep.subr.mxu0 0.0
    %1318 = vmatpush1.msra.mxu0 %v1271
    %1319 = vmatprep.subr.mxu0 0.0
    %1320 = vmatpush1.msra.mxu0 0.0
    %1321 = vmatprep.subr.mxu0 0.0
    %1322 = vmatpush1.msra.mxu0 0.0
    %1323 = vmatprep.subr.mxu0 0.0
    %1324 = vmatpush1.msra.mxu0 0.0
    %1325 = vmatprep.subr.mxu0 0.0
    %1326 = vmatpush1.msra.mxu0 0.0
    %1327 = vmatprep.subr.mxu0 0.0
    %1328 = vmatpush1.msra.mxu0 0.0
    %1329 = vmatprep.subr.mxu0 0.0
    %1330 = vmatpush1.msra.mxu0 0.0
    %1331 = vmatprep.subr.mxu0 0.0
    %1332 = vmatpush1.msra.mxu0 0.0
    %1333 = vmatprep.subr.mxu0 0.0
    %1334 = vmatpush1.msra.mxu0 0.0
    %1335 = vmatprep.subr.mxu0 0.0
    %1336 = vmatpush1.msra.mxu0 0.0
    %1337 = vmatprep.subr.mxu0 0.0
    %1338 = vmatpush1.msra.mxu0 0.0
    %1339 = vmatprep.subr.mxu0 0.0
    %1340 = vmatpush1.msra.mxu0 0.0
    %1341 = vmatprep.subr.mxu0 0.0
    %1342 = vmatpush1.msra.mxu0 0.0
    %1343 = vmatprep.subr.mxu0 0.0
    %1344 = vmatpush1.msra.mxu0 0.0
    %1345 = vmatprep.subr.mxu0 0.0
    %1346 = vmatpush1.msra.mxu0 0.0
    %1347 = vmatprep.subr.mxu0 0.0
    %1348 = vmatpush1.msra.mxu0 0.0
    %1349 = vmatprep.subr.mxu0 0.0
    %1350 = vmatpush1.msra.mxu0 0.0
    %1351 = vmatprep.subr.mxu0 0.0
    %1352 = vmatpush1.msra.mxu0 0.0
    %1353 = vmatprep.subr.mxu0 0.0
    %1354 = vmatpush1.msra.mxu0 0.0
    %1355 = vmatprep.subr.mxu0 0.0
    %1356 = vmatpush1.msra.mxu0 0.0
    %1357 = vmatprep.subr.mxu0 0.0
    %1358 = vmatpush1.msra.mxu0 0.0
    %1359 = vmatprep.subr.mxu0 0.0
    %1360 = vmatpush1.msra.mxu0 0.0
    %1361 = vmatprep.subr.mxu0 0.0
    %1362 = vmatpush1.msra.mxu0 0.0
    %1363 = vmatprep.subr.mxu0 0.0
    %1364 = vmatpush1.msra.mxu0 0.0
    %1365 = vmatprep.subr.mxu0 0.0
    %1366 = vmatpush1.msra.mxu0 0.0
    %1367 = vmatprep.mubr.f32.mxu0 0.0
    %1368 = vmatmul.mubr.f32.gmra.mrb[0].mxu0 %v1280
    %v1369 = vpop.f32.mrb[0].mxu0
    %v1370 = vadd.f32 %v1277, %v1369
    %v1371 = vpop.f32.mrb[0].mxu0
    %1372 = vmatprep.mubr.f32.mxu0 0.0
    %1373 = vmatmul.mubr.f32.gmra.mrb[0].mxu0 %v1283
    %v1374 = vpop.f32.mrb[0].mxu0
    %v1375 = vadd.f32 %v1277, %v1374
    %v1376 = vpop.f32.mrb[0].mxu0
    %1377 = vmatprep.mubr.f32.mxu0 0.0
    %1378 = vmatmul.mubr.f32.gmra.mrb[0].mxu0 %v1286
    %v1379 = vpop.f32.mrb[0].mxu0
    %v1380 = vadd.f32 %v1277, %v1379
    %v1381 = vpop.f32.mrb[0].mxu0
    %1382 = vmatprep.mubr.f32.mxu0 0.0
    %1383 = vmatmul.mubr.f32.gmra.mrb[0].mxu0 %v1289
    %v1384 = vpop.f32.mrb[0].mxu0
    %v1385 = vadd.f32 %v1277, %v1384
    %v1386 = vpop.f32.mrb[0].mxu0
    %1387 = vmatprep.mubr.f32.mxu0 0.0
    %1388 = vmatmul.mubr.f32.gmra.mrb[0].mxu0 %v1292
    %v1389 = vpop.f32.mrb[0].mxu0
    %v1390 = vadd.f32 %v1277, %v1389
    %v1391 = vpop.f32.mrb[0].mxu0
    %1392 = vmatprep.mubr.f32.mxu0 0.0
    %1393 = vmatmul.mubr.f32.gmra.mrb[0].mxu0 %v1295
    %v1394 = vpop.f32.mrb[0].mxu0
    %v1395 = vadd.f32 %v1277, %v1394
    %v1396 = vpop.f32.mrb[0].mxu0
    %1397 = vmatprep.mubr.f32.mxu0 0.0
    %1398 = vmatmul.mubr.f32.gmra.mrb[0].mxu0 %v1298
    %v1399 = vpop.f32.mrb[0].mxu0
    %v1400 = vadd.f32 %v1277, %v1399
    %v1401 = vpop.f32.mrb[0].mxu0
    %1402 = vmatprep.mubr.f32.mxu0 0.0
    %1403 = vmatmul.mubr.f32.gmra.mrb[0].mxu0 %v1301
    %v1404 = vpop.f32.mrb[0].mxu0
    %v1405 = vadd.f32 %v1277, %v1404
    %v1406 = vpop.f32.mrb[0].mxu0
    %1407 = vdwg.mxu0
    %v1408 = vxor.u32 %v1370, 2147483648
    %v1409 = vxor.u32 %v1375, 2147483648
    %v1410 = vxor.u32 %v1380, 2147483648
    %v1411 = vxor.u32 %v1385, 2147483648
    %v1412 = vxor.u32 %v1390, 2147483648
    %v1413 = vxor.u32 %v1395, 2147483648
    %v1414 = vxor.u32 %v1400, 2147483648
    %v1415 = vxor.u32 %v1405, 2147483648
    %v1416 = vmul.f32 %v1408, 1.442695
    %v1417 = vpow.pop %v1416
    %v1418 = vmul.f32 %v1409, 1.442695
    %v1419 = vpow.pop %v1418
    %v1420 = vmul.f32 %v1410, 1.442695
    %v1421 = vpow.pop %v1420
    %v1422 = vmul.f32 %v1411, 1.442695
    %v1423 = vpow.pop %v1422
    %v1424 = vmul.f32 %v1412, 1.442695
    %v1425 = vpow.pop %v1424
    %v1426 = vmul.f32 %v1413, 1.442695
    %v1427 = vpow.pop %v1426
    %v1428 = vmul.f32 %v1414, 1.442695
    %v1429 = vpow.pop %v1428
    %v1430 = vmul.f32 %v1415, 1.442695
    %v1431 = vpow.pop %v1430
    %v1432 = vadd.f32 %v1417, 1.0
    %v1433 = vadd.f32 %v1419, 1.0
    %v1434 = vadd.f32 %v1421, 1.0
    %v1435 = vadd.f32 %v1423, 1.0
    %v1436 = vadd.f32 %v1425, 1.0
    %v1437 = vadd.f32 %v1427, 1.0
    %v1438 = vadd.f32 %v1429, 1.0
    %v1439 = vadd.f32 %v1431, 1.0
    %v1440 = vrcp.pop %v1432
    %v1441 = vmul.f32 1.0, %v1440
    %v1442 = vrcp.pop %v1433
    %v1443 = vmul.f32 1.0, %v1442
    %v1444 = vrcp.pop %v1434
    %v1445 = vmul.f32 1.0, %v1444
    %v1446 = vrcp.pop %v1435
    %v1447 = vmul.f32 1.0, %v1446
    %v1448 = vrcp.pop %v1436
    %v1449 = vmul.f32 1.0, %v1448
    %v1450 = vrcp.pop %v1437
    %v1451 = vmul.f32 1.0, %v1450
    %v1452 = vrcp.pop %v1438
    %v1453 = vmul.f32 1.0, %v1452
    %v1454 = vrcp.pop %v1439
    %v1455 = vmul.f32 1.0, %v1454
    %1456 = vst [vmem:[#allocation7] sm:$0xff] %v1441
    %1457 = vst [vmem:[#allocation7 + $0x8] sm:$0xff] %v1443
    %1458 = vst [vmem:[#allocation7 + $0x10] sm:$0xff] %v1445
    %1459 = vst [vmem:[#allocation7 + $0x18] sm:$0xff] %v1447
    %1460 = vst [vmem:[#allocation7 + $0x20] sm:$0xff] %v1449
    %1461 = vst [vmem:[#allocation7 + $0x28] sm:$0xff] %v1451
    %1462 = vst [vmem:[#allocation7 + $0x30] sm:$0xff] %v1453
    %1463 = vst [vmem:[#allocation7 + $0x38] sm:$0xff] %v1455
    // Predicated region
    $region46: #{tpu_custom_call.1} parent=1 // pred_check
      _
    $region47: #{tpu_custom_call.1} parent=1 // pred_check_branch
      %1465 = sbr.rel (0) target = $region49
    $region48: #{tpu_custom_call.1} parent=1 // pred_region
      %s1467 = ssub.s32 1024, 1024
      %1468 = vsyncadd [#allocation4], %s1467
      %s1469 = sshll.u32 [#allocation7], 4
      %s1470 = int_to_ptr.vmem [resolvable:$true] %s1469
      %1475 = dma.vmem_to_hbm [thread:$0]  %s1470, 1024, %s9, [#allocation4], 128, 128, 8
    $region49: #{tpu_custom_call.1} parent=1 // pred_fallthru
      _
    // Predicated region
    $region50: #{tpu_custom_call.1} parent=1 // pred_check
      _
    $region51: #{tpu_custom_call.1} parent=1 // pred_check_branch
      %1477 = sbr.rel (0) target = $region53
    $region52: #{tpu_custom_call.1} parent=1 // pred_region
      %1478 = dma.done [#allocation4], 1024
    $region53: #{tpu_custom_call.1} parent=1 // pred_fallthru
      _
    %1479 = vsyncpa [#allocation3], 1
    %1480 = vsyncpa [#allocation6], 1
    %1481 = vsyncpa [#allocation4], 1

</llo_original>
